<compile_context>
chip_gen: v7x
topology: tpu7x:2x2x1
jax: 0.10.0
libtpu: 0.0.40
codegen_flags: <defaults>
</compile_context>

<pallas_src>
import numpy as np

import jax
import jax.numpy as jnp
from jax import lax
from jax.experimental import pallas as pl
from jax.experimental.pallas import tpu as pltpu

# ----------------------- model dimensions (small, synthetic) ------------------
B, S, E = 2, 7, 32          # batch, seq, encoder_dim
N = S + 1                   # seq + head sentinel
BN = B * N                  # 16 tokens total (flattened batch*seq)
ARC = 16                    # arc_representation_dim
TAG = 16                    # tag_representation_dim
GRAM = 8                    # grammar_value_count
LEMMA = 16                  # lemma_count
HEAD_TAG = 8                # head_tag_count
NEG = -1e32                 # mask penalty used by the PyTorch code

# packed stage-1 projection column layout (width 128):
HA_OFF = 0                  # head_arc_feedforward
CA_OFF = ARC                # child_arc_feedforward       16
HT_OFF = 2 * ARC            # head_tag_feedforward        32
CT_OFF = 3 * ARC            # child_tag_feedforward       48
G_OFF = 4 * ARC             # grammar_value_output        64
L_OFF = G_OFF + GRAM        # lemma_output                72
PROJ_W = 128

# fused stage-2 weight (W2) column layout (width 152):
HK_COL = 0                  # 128 cols: hk2 = ht @ W_k (packed over k)
TH_COL = HEAD_TAG * TAG     # 128: 16 cols: th = ha @ W11
CB_COL = TH_COL + ARC       # 144: 1 col:  cb = w_c . ca
W2_W = 152

# static weight-slab row layout:
W1_ROW = 0                  # rows 0:32  stage-1 packed projection (cols 0:128)
W2_ROW = E                  # rows 32:80 fused stage-2 weight (48 x 152)
B1_ROW = E + 3 * ARC        # row 80     stage-1 packed bias (cols 0:128)
WH_ROW = B1_ROW + 1         # row 81     arc head-side input-bias weight w_h (cols 0:16)
WSLAB_ROWS = 88

# dynamic parameter slab rows (runtime per call):
BT_ROW = BN                 # row 16: tag-bilinear bias (lanes 0:HEAD_TAG)
DYN_ROWS = 24


# ----------------------------- in-kernel helpers ------------------------------
def _elu(x):
    # torch.nn.ELU(alpha=1.0).
    # TODO(synk): exp(x)-1 instead of expm1 (slightly looser for tiny negative x).
    return jnp.where(x > 0, x, jnp.exp(x) - 1.0)


def _argmax_last(x):
    # argmax over the last axis, first-occurrence tie break (matches torch).
    m = jnp.max(x, axis=-1, keepdims=True)
    idx = lax.broadcasted_iota(jnp.int32, x.shape, x.ndim - 1)
    return jnp.min(jnp.where(x == m, idx, jnp.int32(2 ** 30)), axis=-1)


def _dot_t(a, b):
    # (M, K) x (N, K) -> (M, N): contract trailing dims of both operands so Mosaic
    # can use its transposed-RHS matmul path (no separate XLU transpose emitted here).
    return lax.dot_general(a, b, (((1,), (1,)), ((), ())),
                           preferred_element_type=jnp.float32)


# ------------------------------ fused kernel ----------------------------------
def fused_kernel(x_ref, w_ref, d_ref, gram_ref, lemma_ref, scores_ref, tags_ref):
    x = x_ref[...]                                               # (16, 32) sentinel pre-prepended
    w1 = w_ref[W1_ROW:W1_ROW + E, 0:PROJ_W]                      # (32, 128)
    b1 = w_ref[B1_ROW:B1_ROW + 1, 0:PROJ_W]                      # (1, 128)

    # --- stage 1: ONE packed projection for all six linear heads ---
    proj = jnp.dot(x, w1, preferred_element_type=jnp.float32) + b1   # (16, 128)

    # morphology / lemma heads: argmax of logits (sentinel row dropped by the wrapper)
    gram_ref[...] = _argmax_last(proj[:, G_OFF:G_OFF + GRAM].reshape(B, N, GRAM))
    lemma_ref[...] = _argmax_last(proj[:, L_OFF:L_OFF + LEMMA].reshape(B, N, LEMMA))

    # four feedforward heads share one ELU over a contiguous 64-lane slice
    ff = _elu(proj[:, 0:4 * ARC])                                # (16, 64)
    ha2 = ff[:, HA_OFF:HA_OFF + ARC]
    ca2 = ff[:, CA_OFF:CA_OFF + ARC]
    ct2 = ff[:, CT_OFF:CT_OFF + ARC]

    # --- fused stage-2 matmul: [ha | ca | ht] @ W2 -> [hk2 | th | cb] ---
    big = jnp.dot(ff[:, 0:3 * ARC], w_ref[W2_ROW:W2_ROW + 3 * ARC, :],
                  preferred_element_type=jnp.float32)            # (16, 152)
    hk2 = big[:, HK_COL:HK_COL + HEAD_TAG * TAG]                 # (16, 128)  ht @ W_k (packed)
    th = big[:, TH_COL:TH_COL + ARC]                             # (16, 16)   ha @ W11
    cb_col = big[:, CB_COL:CB_COL + 1]                           # (16, 1)    w_c . ca (per-row add)
    # head-side input bias ha . w_h as a (1,16) row (per-column add); read an
    # 8-row aligned weight block (row 1 of it is w_h) to keep the operand aligned.
    hb_row = _dot_t(w_ref[B1_ROW:B1_ROW + 8, 0:ARC], ha2)[1:2, :]    # (1, 16)

    # --- BilinearMatrixAttention(use_input_biases=True), transposed orientation ---
    # att[x, y] = ca_x . W11 . ha_y + hb_y + cb_x + scalar_bias + pen_x + pen_y
    # penalties / scalar bias come pre-combined from trace time (d_ref rows 0:16);
    # cross-batch positions carry -1e32 so the flattened softmax stays per-batch.
    penc = d_ref[0:BN, :]                                        # (16, 16)
    att = _dot_t(ca2, th) + hb_row + cb_col + penc               # (16, 16)

    # normalized_arc_logits = log_softmax(attended, dim=2).transpose(1, 2)
    cmax = jnp.max(att, axis=0, keepdims=True)
    na = att - (cmax + jnp.log(jnp.sum(jnp.exp(att - cmax), axis=0, keepdims=True)))

    # --- nn.Bilinear(tag, tag, head_tag_count): 8 flattened 2-D dots, shared RHS ---
    btrow = d_ref[BT_ROW:BT_ROW + 1, :]                          # (1, 16); lanes 0:8 = bias
    pks = []
    for k in range(HEAD_TAG):                                    # independent; no serial chain
        pk = _dot_t(hk2[:, k * TAG:(k + 1) * TAG], ct2)          # (16, 16)
        pks.append(pk + btrow[:, k:k + 1])
    pair = jnp.stack(pks, axis=0)                                # (8, 16, 16)

    # log_softmax over k; energy = exp(na + log_softmax_k); exp is monotone and na is
    # k-independent, so max_k / argmax_k are computed directly (fully vectorized).
    pmax = jnp.max(pair, axis=0)
    kidx = lax.broadcasted_iota(jnp.int32, pair.shape, 0)
    pidx = jnp.min(jnp.where(pair == pmax[None], kidx, jnp.int32(HEAD_TAG)), axis=0)
    tag_lse = pmax + jnp.log(jnp.sum(jnp.exp(pair - pmax[None]), axis=0))

    scores_ref[...] = jnp.exp(na + pmax - tag_lse)               # (16, 16)
    tags_ref[...] = pidx                                         # (16, 16) int32


# ------------------------------- wrapper ---------------------------------------
def _fullspec(shape):
    nd = len(shape)
    return pl.BlockSpec(shape, lambda i, _nd=nd: (0,) * _nd)


def _forward(x2, wslab, dynp):
    out_shape = (jax.ShapeDtypeStruct((B, N), jnp.int32),
                 jax.ShapeDtypeStruct((B, N), jnp.int32),
                 jax.ShapeDtypeStruct((BN, BN), jnp.float32),
                 jax.ShapeDtypeStruct((BN, BN), jnp.int32))
    return pl.pallas_call(
        fused_kernel,
        grid=(1,),
        in_specs=[_fullspec(x2.shape), _fullspec(wslab.shape), _fullspec(dynp.shape)],
        out_specs=tuple(_fullspec(o.shape) for o in out_shape),
        out_shape=out_shape,
        cost_estimate=pl.CostEstimate(flops=438_784, transcendentals=3_900,
                                      bytes_accessed=59_264),
        compiler_params=pltpu.CompilerParams(dimension_semantics=("arbitrary",)),
    )(x2, wslab, dynp)


@jax.jit
def run_model(encoded_text, mask, params):
    # --- trace-time prep (tiny XLA ops, kept off the latency-critical kernel) ---
    sentinel = jnp.broadcast_to(params['sentinel'], (B, 1, E))
    x2 = jnp.concatenate([sentinel, encoded_text], axis=1).reshape(BN, E)   # (16, 32)

    mask_full = jnp.concatenate([jnp.ones((B, 1), jnp.float32), mask], axis=1)  # (B, N)
    pen = ((1.0 - mask_full) * NEG).reshape(BN)                  # (16,)
    same_blk = jnp.kron(jnp.eye(B, dtype=jnp.float32), jnp.ones((N, N), jnp.float32))
    penc = jnp.where(same_blk > 0.5,
                     pen[:, None] + pen[None, :] + params['arc_const'],
                     jnp.float32(NEG))                           # (16, 16)
    dynp = jnp.zeros((DYN_ROWS, BN), jnp.float32)
    dynp = dynp.at[0:BN, :].set(penc)
    dynp = dynp.at[BT_ROW, 0:HEAD_TAG].set(params['b_tag'].reshape(HEAD_TAG))

    gram, lemma, scores_full, tags_full = _forward(x2, params['wslab'], dynp)

    # per-batch diagonal blocks + sentinel drop: free XLA layout work outside the kernel
    gram_vals = gram[:, 1:]
    lemmas = lemma[:, 1:]
    scores = jnp.stack([scores_full[b * N:(b + 1) * N, b * N:(b + 1) * N]
                        for b in range(B)], axis=0)
    tag_ids = jnp.stack([tags_full[b * N:(b + 1) * N, b * N:(b + 1) * N]
                         for b in range(B)], axis=0)
    return gram_vals, lemmas, scores, tag_ids


def greedy_decode(scores, tag_ids, lengths):
    # TODO(synk): original uses Chu-Liu-Edmonds MST (decode_mst, host-side sequential
    # numpy); greedy per-child argmax over head scores is used here instead.
    scores = np.asarray(scores)
    tag_ids = np.asarray(tag_ids)
    lengths = np.asarray(lengths)
    bsz, n, _ = scores.shape
    heads = np.zeros((bsz, n), dtype=np.int64)
    head_tags = np.zeros((bsz, n), dtype=np.int64)
    for b in range(bsz):
        sc = scores[b].copy()
        sc[0, :] = 0.0                      # matches _run_mst_decoding
        length = int(lengths[b])
        for child in range(1, length):
            parent = int(np.argmax(sc[:length, child]))
            heads[b, child] = parent
            head_tags[b, child] = int(tag_ids[b, parent, child])
        heads[b, 0] = 0
        head_tags[b, 0] = 0
    return heads, head_tags


# --------------------------------- main -----------------------------------------
if __name__ == "__main__":
    root = jax.random.PRNGKey(0)
    keys = iter(jax.random.split(root, 32))

    def rnd(shape, scale=0.1):
        return jax.random.normal(next(keys), shape, dtype=jnp.float32) * scale

    # Stand-in for encoder(embedder(inputs)).
    # TODO(synk): Embedder / LstmEncoder are external modules not defined in the source.
    encoded_text = jax.random.normal(next(keys), (B, S, E), dtype=jnp.float32)
    mask = jnp.array([[1, 1, 1, 1, 1, 1, 1],
                      [1, 1, 1, 1, 1, 0, 0]], dtype=jnp.float32)      # (B, S)

    # Deterministic synthetic parameters (shapes from Model.__init__).
    wg, bg = rnd((E, GRAM)), rnd((1, GRAM))            # grammar_value_output
    wl, bl = rnd((E, LEMMA)), rnd((1, LEMMA))          # lemma_output
    w_ha, b_ha = rnd((E, ARC)), rnd((1, ARC))          # head_arc_feedforward
    w_ca, b_ca = rnd((E, ARC)), rnd((1, ARC))          # child_arc_feedforward
    w_ht, b_ht = rnd((E, TAG)), rnd((1, TAG))          # head_tag_feedforward
    w_ct, b_ct = rnd((E, TAG)), rnd((1, TAG))          # child_tag_feedforward
    w_tag = rnd((HEAD_TAG, TAG, TAG))                  # nn.Bilinear weight
    b_tag = rnd((1, HEAD_TAG))                         # nn.Bilinear bias
    sentinel = rnd((1, 1, E), scale=1.0)               # head_sentinel
    w_arc_full = rnd((ARC + 1, ARC + 1))               # BilinearMatrixAttention weight
    arc_bias = rnd((1, 1))                             # BilinearMatrixAttention scalar bias

    # ---- trace-time packing: ONE static weight slab (88 x 152) ----
    wslab = jnp.zeros((WSLAB_ROWS, W2_W), jnp.float32)
    # stage-1 packed projection weight
    wslab = (wslab.at[W1_ROW:W1_ROW + E, HA_OFF:HA_OFF + ARC].set(w_ha)
                   .at[W1_ROW:W1_ROW + E, CA_OFF:CA_OFF + ARC].set(w_ca)
                   .at[W1_ROW:W1_ROW + E, HT_OFF:HT_OFF + ARC].set(w_ht)
                   .at[W1_ROW:W1_ROW + E, CT_OFF:CT_OFF + ARC].set(w_ct)
                   .at[W1_ROW:W1_ROW + E, G_OFF:G_OFF + GRAM].set(wg)
                   .at[W1_ROW:W1_ROW + E, L_OFF:L_OFF + LEMMA].set(wl))
    # stage-1 packed bias row
    wslab = (wslab.at[B1_ROW, HA_OFF:HA_OFF + ARC].set(b_ha[0])
                   .at[B1_ROW, CA_OFF:CA_OFF + ARC].set(b_ca[0])
                   .at[B1_ROW, HT_OFF:HT_OFF + ARC].set(b_ht[0])
                   .at[B1_ROW, CT_OFF:CT_OFF + ARC].set(b_ct[0])
                   .at[B1_ROW, G_OFF:G_OFF + GRAM].set(bg[0])
                   .at[B1_ROW, L_OFF:L_OFF + LEMMA].set(bl[0]))
    # fused stage-2 weight: ha rows -> [th cols], ca rows -> [cb col], ht rows -> [hk2 cols]
    wtag_pack = jnp.transpose(w_tag, (1, 0, 2)).reshape(TAG, HEAD_TAG * TAG)
    wslab = (wslab.at[W2_ROW + HA_OFF:W2_ROW + HA_OFF + ARC, TH_COL:TH_COL + ARC]
                        .set(w_arc_full[:ARC, :ARC])
                   .at[W2_ROW + CA_OFF:W2_ROW + CA_OFF + ARC, CB_COL].set(w_arc_full[ARC, :ARC])
                   .at[W2_ROW + HT_OFF:W2_ROW + HT_OFF + ARC, HK_COL:HK_COL + HEAD_TAG * TAG]
                        .set(wtag_pack)
                   .at[WH_ROW, 0:ARC].set(w_arc_full[:ARC, ARC]))
    arc_const = w_arc_full[ARC, ARC] + arc_bias[0, 0]   # scalar, folded into penalties

    params = {'sentinel': sentinel, 'wslab': wslab, 'b_tag': b_tag, 'arc_const': arc_const}

    gram_vals, lemmas, scores, tag_ids = run_model(encoded_text, mask, params)
    jax.block_until_ready((gram_vals, lemmas, scores, tag_ids))

    mask_full_np = np.concatenate([np.ones((B, 1), np.float32), np.asarray(mask)], axis=1)
    lengths = mask_full_np.sum(axis=1).astype(np.int64)
    heads, head_tags = greedy_decode(scores, tag_ids, lengths)

    output_dict = {
        'mask': np.asarray(mask),
        'gram_vals': np.asarray(gram_vals),   # (B, S) int
        'lemmas': np.asarray(lemmas),         # (B, S) int
        'heads': heads,                       # (B, S+1) int
        'head_tags': head_tags,               # (B, S+1) int
    }
    assert output_dict['gram_vals'].shape == (B, S)
    assert output_dict['lemmas'].shape == (B, S)
    assert output_dict['heads'].shape == (B, N)
    assert output_dict['head_tags'].shape == (B, N)
    print("KERNEL_OK")
</pallas_src>

<mosaic_0001>
module attributes {stable_mosaic.version = 11 : i64} {
  func.func @fused_kernel(%arg0: i32, %arg1: memref<16x32xf32, #tpu.memory_space<vmem>>, %arg2: memref<88x152xf32, #tpu.memory_space<vmem>>, %arg3: memref<24x16xf32, #tpu.memory_space<vmem>>, %arg4: memref<2x8xi32, #tpu.memory_space<vmem>>, %arg5: memref<2x8xi32, #tpu.memory_space<vmem>>, %arg6: memref<16x16xf32, #tpu.memory_space<vmem>>, %arg7: memref<16x16xi32, #tpu.memory_space<vmem>>) attributes {dimension_semantics = [#tpu.dimension_semantics<arbitrary>], iteration_bounds = array<i64: 1>, scalar_prefetch = 0 : i64, scratch_operands = 0 : i64, tpu.core_type = #tpu.core_type<tc>, window_params = [{pipeline_mode = #tpu.pipeline_mode<synchronous>, transform_indices = @transform_0, window_bounds = array<i64: 16, 32>}, {pipeline_mode = #tpu.pipeline_mode<synchronous>, transform_indices = @transform_1, window_bounds = array<i64: 88, 152>}, {pipeline_mode = #tpu.pipeline_mode<synchronous>, transform_indices = @transform_2, window_bounds = array<i64: 24, 16>}, {pipeline_mode = #tpu.pipeline_mode<synchronous>, transform_indices = @transform_3, window_bounds = array<i64: 2, 8>}, {pipeline_mode = #tpu.pipeline_mode<synchronous>, transform_indices = @transform_4, window_bounds = array<i64: 2, 8>}, {pipeline_mode = #tpu.pipeline_mode<synchronous>, transform_indices = @transform_5, window_bounds = array<i64: 16, 16>}, {pipeline_mode = #tpu.pipeline_mode<synchronous>, transform_indices = @transform_6, window_bounds = array<i64: 16, 16>}]} {
    %c0 = arith.constant 0 : index
    %c0_0 = arith.constant 0 : index
    %0 = vector.load %arg1[%c0, %c0_0] : memref<16x32xf32, #tpu.memory_space<vmem>>, vector<16x32xf32>
    %c0_1 = arith.constant 0 : index
    %c0_2 = arith.constant 0 : index
    %1 = vector.load %arg2[%c0_1, %c0_2] : memref<88x152xf32, #tpu.memory_space<vmem>>, vector<32x128xf32>
    %c80 = arith.constant 80 : index
    %c0_3 = arith.constant 0 : index
    %2 = vector.load %arg2[%c80, %c0_3] : memref<88x152xf32, #tpu.memory_space<vmem>>, vector<1x128xf32>
    %cst = arith.constant dense<0.000000e+00> : vector<16x128xf32>
    %3 = tpu.matmul %0, %1, %cst {dimension_numbers = #tpu.dot_dimension_numbers<[1], [0], [0], [1], [0, 0, 1, 1], [], []>} : vector<16x32xf32>, vector<32x128xf32>, vector<16x128xf32> -> vector<16x128xf32>
    %4 = vector.broadcast %2 : vector<1x128xf32> to vector<16x128xf32>
    %5 = arith.addf %3, %4 : vector<16x128xf32>
    %6 = vector.extract_strided_slice %5 {offsets = [0, 64], sizes = [16, 8], strides = [1, 1]} : vector<16x128xf32> to vector<16x8xf32>
    %7 = vector.shape_cast %6 : vector<16x8xf32> to vector<2x8x8xf32>
    %cst_4 = arith.constant dense<0xFF800000> : vector<2x8xf32>
    %8 = vector.multi_reduction <maximumf>, %7, %cst_4 [2] : vector<2x8x8xf32> to vector<2x8xf32>
    %9 = vector.shape_cast %8 : vector<2x8xf32> to vector<2x8x1xf32>
    %10 = tpu.iota {dimensions = array<i32: 2>} : vector<2x8x8xi32>
    %11 = vector.broadcast %9 : vector<2x8x1xf32> to vector<2x8x8xf32>
    %12 = arith.cmpf oeq, %7, %11 : vector<2x8x8xf32>
    %c1073741824_i32 = arith.constant 1073741824 : i32
    %13 = vector.broadcast %c1073741824_i32 : i32 to vector<2x8x8xi32>
    %14 = arith.select %12, %10, %13 : vector<2x8x8xi1>, vector<2x8x8xi32>
    %cst_5 = arith.constant dense<2147483647> : vector<2x8xi32>
    %15 = vector.multi_reduction <minsi>, %14, %cst_5 [2] : vector<2x8x8xi32> to vector<2x8xi32>
    %c0_6 = arith.constant 0 : index
    %c0_7 = arith.constant 0 : index
    %16 = vector.load %arg4[%c0_6, %c0_7] : memref<2x8xi32, #tpu.memory_space<vmem>>, vector<2x8xi32>
    tpu.vector_store %arg4[%c0_6, %c0_7], %15 {strides = array<i32>} : memref<2x8xi32, #tpu.memory_space<vmem>>, vector<2x8xi32>,
    %17 = vector.extract_strided_slice %5 {offsets = [0, 72], sizes = [16, 16], strides = [1, 1]} : vector<16x128xf32> to vector<16x16xf32>
    %18 = vector.shape_cast %17 : vector<16x16xf32> to vector<2x8x16xf32>
    %cst_8 = arith.constant dense<0xFF800000> : vector<2x8xf32>
    %19 = vector.multi_reduction <maximumf>, %18, %cst_8 [2] : vector<2x8x16xf32> to vector<2x8xf32>
    %20 = vector.shape_cast %19 : vector<2x8xf32> to vector<2x8x1xf32>
    %21 = tpu.iota {dimensions = array<i32: 2>} : vector<2x8x16xi32>
    %22 = vector.broadcast %20 : vector<2x8x1xf32> to vector<2x8x16xf32>
    %23 = arith.cmpf oeq, %18, %22 : vector<2x8x16xf32>
    %c1073741824_i32_9 = arith.constant 1073741824 : i32
    %24 = vector.broadcast %c1073741824_i32_9 : i32 to vector<2x8x16xi32>
    %25 = arith.select %23, %21, %24 : vector<2x8x16xi1>, vector<2x8x16xi32>
    %cst_10 = arith.constant dense<2147483647> : vector<2x8xi32>
    %26 = vector.multi_reduction <minsi>, %25, %cst_10 [2] : vector<2x8x16xi32> to vector<2x8xi32>
    %c0_11 = arith.constant 0 : index
    %c0_12 = arith.constant 0 : index
    %27 = vector.load %arg5[%c0_11, %c0_12] : memref<2x8xi32, #tpu.memory_space<vmem>>, vector<2x8xi32>
    tpu.vector_store %arg5[%c0_11, %c0_12], %26 {strides = array<i32>} : memref<2x8xi32, #tpu.memory_space<vmem>>, vector<2x8xi32>,
    %28 = vector.extract_strided_slice %5 {offsets = [0, 0], sizes = [16, 64], strides = [1, 1]} : vector<16x128xf32> to vector<16x64xf32>
    %cst_13 = arith.constant 0.000000e+00 : f32
    %29 = vector.broadcast %cst_13 : f32 to vector<16x64xf32>
    %30 = arith.cmpf ogt, %28, %29 : vector<16x64xf32>
    %31 = math.exp %28 : vector<16x64xf32>
    %cst_14 = arith.constant 1.000000e+00 : f32
    %32 = vector.broadcast %cst_14 : f32 to vector<16x64xf32>
    %33 = arith.subf %31, %32 : vector<16x64xf32>
    %34 = arith.select %30, %28, %33 : vector<16x64xi1>, vector<16x64xf32>
    %35 = vector.extract_strided_slice %34 {offsets = [0, 0], sizes = [16, 16], strides = [1, 1]} : vector<16x64xf32> to vector<16x16xf32>
    %36 = vector.extract_strided_slice %34 {offsets = [0, 16], sizes = [16, 16], strides = [1, 1]} : vector<16x64xf32> to vector<16x16xf32>
    %37 = vector.extract_strided_slice %34 {offsets = [0, 48], sizes = [16, 16], strides = [1, 1]} : vector<16x64xf32> to vector<16x16xf32>
    %38 = vector.extract_strided_slice %34 {offsets = [0, 0], sizes = [16, 48], strides = [1, 1]} : vector<16x64xf32> to vector<16x48xf32>
    %c32 = arith.constant 32 : index
    %c0_15 = arith.constant 0 : index
    %39 = vector.load %arg2[%c32, %c0_15] : memref<88x152xf32, #tpu.memory_space<vmem>>, vector<48x152xf32>
    %cst_16 = arith.constant dense<0.000000e+00> : vector<16x152xf32>
    %40 = tpu.matmul %38, %39, %cst_16 {dimension_numbers = #tpu.dot_dimension_numbers<[1], [0], [0], [1], [0, 0, 1, 1], [], []>} : vector<16x48xf32>, vector<48x152xf32>, vector<16x152xf32> -> vector<16x152xf32>
    %41 = vector.extract_strided_slice %40 {offsets = [0, 0], sizes = [16, 128], strides = [1, 1]} : vector<16x152xf32> to vector<16x128xf32>
    %42 = vector.extract_strided_slice %40 {offsets = [0, 128], sizes = [16, 16], strides = [1, 1]} : vector<16x152xf32> to vector<16x16xf32>
    %43 = vector.extract_strided_slice %40 {offsets = [0, 144], sizes = [16, 1], strides = [1, 1]} : vector<16x152xf32> to vector<16x1xf32>
    %c80_17 = arith.constant 80 : index
    %c0_18 = arith.constant 0 : index
    %44 = vector.load %arg2[%c80_17, %c0_18] : memref<88x152xf32, #tpu.memory_space<vmem>>, vector<8x16xf32>
    %cst_19 = arith.constant dense<0.000000e+00> : vector<8x16xf32>
    %45 = tpu.matmul %44, %35, %cst_19 {dimension_numbers = #tpu.dot_dimension_numbers<[1], [1], [0], [0], [0, 0, 1, 0], [], []>} : vector<8x16xf32>, vector<16x16xf32>, vector<8x16xf32> -> vector<8x16xf32>
    %46 = vector.extract_strided_slice %45 {offsets = [1, 0], sizes = [1, 16], strides = [1, 1]} : vector<8x16xf32> to vector<1x16xf32>
    %c0_20 = arith.constant 0 : index
    %c0_21 = arith.constant 0 : index
    %47 = vector.load %arg3[%c0_20, %c0_21] : memref<24x16xf32, #tpu.memory_space<vmem>>, vector<16x16xf32>
    %cst_22 = arith.constant dense<0.000000e+00> : vector<16x16xf32>
    %48 = tpu.matmul %36, %42, %cst_22 {dimension_numbers = #tpu.dot_dimension_numbers<[1], [1], [0], [0], [0, 0, 1, 0], [], []>} : vector<16x16xf32>, vector<16x16xf32>, vector<16x16xf32> -> vector<16x16xf32>
    %49 = vector.broadcast %46 : vector<1x16xf32> to vector<16x16xf32>
    %50 = arith.addf %48, %49 : vector<16x16xf32>
    %51 = vector.broadcast %43 : vector<16x1xf32> to vector<16x16xf32>
    %52 = arith.addf %50, %51 : vector<16x16xf32>
    %53 = arith.addf %52, %47 : vector<16x16xf32>
    %cst_23 = arith.constant dense<0xFF800000> : vector<16xf32>
    %54 = vector.multi_reduction <maximumf>, %53, %cst_23 [0] : vector<16x16xf32> to vector<16xf32>
    %55 = vector.shape_cast %54 : vector<16xf32> to vector<1x16xf32>
    %56 = vector.broadcast %55 : vector<1x16xf32> to vector<16x16xf32>
    %57 = arith.subf %53, %56 : vector<16x16xf32>
    %58 = math.exp %57 : vector<16x16xf32>
    %cst_24 = arith.constant dense<0.000000e+00> : vector<16xf32>
    %59 = vector.multi_reduction <add>, %58, %cst_24 [0] : vector<16x16xf32> to vector<16xf32>
    %60 = vector.shape_cast %59 : vector<16xf32> to vector<1x16xf32>
    %61 = math.log %60 : vector<1x16xf32>
    %62 = arith.addf %55, %61 : vector<1x16xf32>
    %63 = vector.broadcast %62 : vector<1x16xf32> to vector<16x16xf32>
    %64 = arith.subf %53, %63 : vector<16x16xf32>
    %c16 = arith.constant 16 : index
    %c0_25 = arith.constant 0 : index
    %65 = vector.load %arg3[%c16, %c0_25] : memref<24x16xf32, #tpu.memory_space<vmem>>, vector<1x16xf32>
    %66 = vector.extract_strided_slice %41 {offsets = [0, 0], sizes = [16, 16], strides = [1, 1]} : vector<16x128xf32> to vector<16x16xf32>
    %cst_26 = arith.constant dense<0.000000e+00> : vector<16x16xf32>
    %67 = tpu.matmul %66, %37, %cst_26 {dimension_numbers = #tpu.dot_dimension_numbers<[1], [1], [0], [0], [0, 0, 1, 0], [], []>} : vector<16x16xf32>, vector<16x16xf32>, vector<16x16xf32> -> vector<16x16xf32>
    %68 = vector.extract_strided_slice %65 {offsets = [0, 0], sizes = [1, 1], strides = [1, 1]} : vector<1x16xf32> to vector<1x1xf32>
    %69 = vector.broadcast %68 : vector<1x1xf32> to vector<16x16xf32>
    %70 = arith.addf %67, %69 : vector<16x16xf32>
    %71 = vector.extract_strided_slice %41 {offsets = [0, 16], sizes = [16, 16], strides = [1, 1]} : vector<16x128xf32> to vector<16x16xf32>
    %cst_27 = arith.constant dense<0.000000e+00> : vector<16x16xf32>
    %72 = tpu.matmul %71, %37, %cst_27 {dimension_numbers = #tpu.dot_dimension_numbers<[1], [1], [0], [0], [0, 0, 1, 0], [], []>} : vector<16x16xf32>, vector<16x16xf32>, vector<16x16xf32> -> vector<16x16xf32>
    %73 = vector.extract_strided_slice %65 {offsets = [0, 1], sizes = [1, 1], strides = [1, 1]} : vector<1x16xf32> to vector<1x1xf32>
    %74 = vector.broadcast %73 : vector<1x1xf32> to vector<16x16xf32>
    %75 = arith.addf %72, %74 : vector<16x16xf32>
    %76 = vector.extract_strided_slice %41 {offsets = [0, 32], sizes = [16, 16], strides = [1, 1]} : vector<16x128xf32> to vector<16x16xf32>
    %cst_28 = arith.constant dense<0.000000e+00> : vector<16x16xf32>
    %77 = tpu.matmul %76, %37, %cst_28 {dimension_numbers = #tpu.dot_dimension_numbers<[1], [1], [0], [0], [0, 0, 1, 0], [], []>} : vector<16x16xf32>, vector<16x16xf32>, vector<16x16xf32> -> vector<16x16xf32>
    %78 = vector.extract_strided_slice %65 {offsets = [0, 2], sizes = [1, 1], strides = [1, 1]} : vector<1x16xf32> to vector<1x1xf32>
    %79 = vector.broadcast %78 : vector<1x1xf32> to vector<16x16xf32>
    %80 = arith.addf %77, %79 : vector<16x16xf32>
    %81 = vector.extract_strided_slice %41 {offsets = [0, 48], sizes = [16, 16], strides = [1, 1]} : vector<16x128xf32> to vector<16x16xf32>
    %cst_29 = arith.constant dense<0.000000e+00> : vector<16x16xf32>
    %82 = tpu.matmul %81, %37, %cst_29 {dimension_numbers = #tpu.dot_dimension_numbers<[1], [1], [0], [0], [0, 0, 1, 0], [], []>} : vector<16x16xf32>, vector<16x16xf32>, vector<16x16xf32> -> vector<16x16xf32>
    %83 = vector.extract_strided_slice %65 {offsets = [0, 3], sizes = [1, 1], strides = [1, 1]} : vector<1x16xf32> to vector<1x1xf32>
    %84 = vector.broadcast %83 : vector<1x1xf32> to vector<16x16xf32>
    %85 = arith.addf %82, %84 : vector<16x16xf32>
    %86 = vector.extract_strided_slice %41 {offsets = [0, 64], sizes = [16, 16], strides = [1, 1]} : vector<16x128xf32> to vector<16x16xf32>
    %cst_30 = arith.constant dense<0.000000e+00> : vector<16x16xf32>
    %87 = tpu.matmul %86, %37, %cst_30 {dimension_numbers = #tpu.dot_dimension_numbers<[1], [1], [0], [0], [0, 0, 1, 0], [], []>} : vector<16x16xf32>, vector<16x16xf32>, vector<16x16xf32> -> vector<16x16xf32>
    %88 = vector.extract_strided_slice %65 {offsets = [0, 4], sizes = [1, 1], strides = [1, 1]} : vector<1x16xf32> to vector<1x1xf32>
    %89 = vector.broadcast %88 : vector<1x1xf32> to vector<16x16xf32>
    %90 = arith.addf %87, %89 : vector<16x16xf32>
    %91 = vector.extract_strided_slice %41 {offsets = [0, 80], sizes = [16, 16], strides = [1, 1]} : vector<16x128xf32> to vector<16x16xf32>
    %cst_31 = arith.constant dense<0.000000e+00> : vector<16x16xf32>
    %92 = tpu.matmul %91, %37, %cst_31 {dimension_numbers = #tpu.dot_dimension_numbers<[1], [1], [0], [0], [0, 0, 1, 0], [], []>} : vector<16x16xf32>, vector<16x16xf32>, vector<16x16xf32> -> vector<16x16xf32>
    %93 = vector.extract_strided_slice %65 {offsets = [0, 5], sizes = [1, 1], strides = [1, 1]} : vector<1x16xf32> to vector<1x1xf32>
    %94 = vector.broadcast %93 : vector<1x1xf32> to vector<16x16xf32>
    %95 = arith.addf %92, %94 : vector<16x16xf32>
    %96 = vector.extract_strided_slice %41 {offsets = [0, 96], sizes = [16, 16], strides = [1, 1]} : vector<16x128xf32> to vector<16x16xf32>
    %cst_32 = arith.constant dense<0.000000e+00> : vector<16x16xf32>
    %97 = tpu.matmul %96, %37, %cst_32 {dimension_numbers = #tpu.dot_dimension_numbers<[1], [1], [0], [0], [0, 0, 1, 0], [], []>} : vector<16x16xf32>, vector<16x16xf32>, vector<16x16xf32> -> vector<16x16xf32>
    %98 = vector.extract_strided_slice %65 {offsets = [0, 6], sizes = [1, 1], strides = [1, 1]} : vector<1x16xf32> to vector<1x1xf32>
    %99 = vector.broadcast %98 : vector<1x1xf32> to vector<16x16xf32>
    %100 = arith.addf %97, %99 : vector<16x16xf32>
    %101 = vector.extract_strided_slice %41 {offsets = [0, 112], sizes = [16, 16], strides = [1, 1]} : vector<16x128xf32> to vector<16x16xf32>
    %cst_33 = arith.constant dense<0.000000e+00> : vector<16x16xf32>
    %102 = tpu.matmul %101, %37, %cst_33 {dimension_numbers = #tpu.dot_dimension_numbers<[1], [1], [0], [0], [0, 0, 1, 0], [], []>} : vector<16x16xf32>, vector<16x16xf32>, vector<16x16xf32> -> vector<16x16xf32>
    %103 = vector.extract_strided_slice %65 {offsets = [0, 7], sizes = [1, 1], strides = [1, 1]} : vector<1x16xf32> to vector<1x1xf32>
    %104 = vector.broadcast %103 : vector<1x1xf32> to vector<16x16xf32>
    %105 = arith.addf %102, %104 : vector<16x16xf32>
    %106 = vector.shape_cast %70 : vector<16x16xf32> to vector<1x16x16xf32>
    %107 = vector.shape_cast %75 : vector<16x16xf32> to vector<1x16x16xf32>
    %108 = vector.shape_cast %80 : vector<16x16xf32> to vector<1x16x16xf32>
    %109 = vector.shape_cast %85 : vector<16x16xf32> to vector<1x16x16xf32>
    %110 = vector.shape_cast %90 : vector<16x16xf32> to vector<1x16x16xf32>
    %111 = vector.shape_cast %95 : vector<16x16xf32> to vector<1x16x16xf32>
    %112 = vector.shape_cast %100 : vector<16x16xf32> to vector<1x16x16xf32>
    %113 = vector.shape_cast %105 : vector<16x16xf32> to vector<1x16x16xf32>
    %114 = tpu.concatenate %106, %107, %108, %109, %110, %111, %112, %113 in 0 : vector<1x16x16xf32>, vector<1x16x16xf32>, vector<1x16x16xf32>, vector<1x16x16xf32>, vector<1x16x16xf32>, vector<1x16x16xf32>, vector<1x16x16xf32>, vector<1x16x16xf32> -> vector<8x16x16xf32>
    %cst_34 = arith.constant dense<0xFF800000> : vector<16x16xf32>
    %115 = vector.multi_reduction <maximumf>, %114, %cst_34 [0] : vector<8x16x16xf32> to vector<16x16xf32>
    %116 = tpu.iota {dimensions = array<i32: 0>} : vector<8x16x16xi32>
    %117 = vector.shape_cast %115 : vector<16x16xf32> to vector<1x16x16xf32>
    %118 = vector.broadcast %117 : vector<1x16x16xf32> to vector<8x16x16xf32>
    %119 = arith.cmpf oeq, %114, %118 : vector<8x16x16xf32>
    %c8_i32 = arith.constant 8 : i32
    %120 = vector.broadcast %c8_i32 : i32 to vector<8x16x16xi32>
    %121 = arith.select %119, %116, %120 : vector<8x16x16xi1>, vector<8x16x16xi32>
    %cst_35 = arith.constant dense<2147483647> : vector<16x16xi32>
    %122 = vector.multi_reduction <minsi>, %121, %cst_35 [0] : vector<8x16x16xi32> to vector<16x16xi32>
    %123 = vector.shape_cast %115 : vector<16x16xf32> to vector<1x16x16xf32>
    %124 = vector.broadcast %123 : vector<1x16x16xf32> to vector<8x16x16xf32>
    %125 = arith.subf %114, %124 : vector<8x16x16xf32>
    %126 = math.exp %125 : vector<8x16x16xf32>
    %cst_36 = arith.constant dense<0.000000e+00> : vector<16x16xf32>
    %127 = vector.multi_reduction <add>, %126, %cst_36 [0] : vector<8x16x16xf32> to vector<16x16xf32>
    %128 = math.log %127 : vector<16x16xf32>
    %129 = arith.addf %115, %128 : vector<16x16xf32>
    %130 = arith.addf %64, %115 : vector<16x16xf32>
    %131 = arith.subf %130, %129 : vector<16x16xf32>
    %132 = math.exp %131 : vector<16x16xf32>
    %c0_37 = arith.constant 0 : index
    %c0_38 = arith.constant 0 : index
    %133 = vector.load %arg6[%c0_37, %c0_38] : memref<16x16xf32, #tpu.memory_space<vmem>>, vector<16x16xf32>
    tpu.vector_store %arg6[%c0_37, %c0_38], %132 {strides = array<i32>} : memref<16x16xf32, #tpu.memory_space<vmem>>, vector<16x16xf32>,
    %c0_39 = arith.constant 0 : index
    %c0_40 = arith.constant 0 : index
    %134 = vector.load %arg7[%c0_39, %c0_40] : memref<16x16xi32, #tpu.memory_space<vmem>>, vector<16x16xi32>
    tpu.vector_store %arg7[%c0_39, %c0_40], %122 {strides = array<i32>} : memref<16x16xi32, #tpu.memory_space<vmem>>, vector<16x16xi32>,
    return
  }
  func.func @transform_0(%arg0: i32) -> (i32, i32) {
    %c0_i32 = arith.constant 0 : i32
    %c0_i32_0 = arith.constant 0 : i32
    %c0_i32_1 = arith.constant 0 : i32
    return %c0_i32, %c0_i32_0 : i32, i32
  }
  func.func @transform_1(%arg0: i32) -> (i32, i32) {
    %c0_i32 = arith.constant 0 : i32
    %c0_i32_0 = arith.constant 0 : i32
    %c0_i32_1 = arith.constant 0 : i32
    return %c0_i32, %c0_i32_0 : i32, i32
  }
  func.func @transform_2(%arg0: i32) -> (i32, i32) {
    %c0_i32 = arith.constant 0 : i32
    %c0_i32_0 = arith.constant 0 : i32
    %c0_i32_1 = arith.constant 0 : i32
    return %c0_i32, %c0_i32_0 : i32, i32
  }
  func.func @transform_3(%arg0: i32) -> (i32, i32) {
    %c0_i32 = arith.constant 0 : i32
    %c0_i32_0 = arith.constant 0 : i32
    %c0_i32_1 = arith.constant 0 : i32
    return %c0_i32, %c0_i32_0 : i32, i32
  }
  func.func @transform_4(%arg0: i32) -> (i32, i32) {
    %c0_i32 = arith.constant 0 : i32
    %c0_i32_0 = arith.constant 0 : i32
    %c0_i32_1 = arith.constant 0 : i32
    return %c0_i32, %c0_i32_0 : i32, i32
  }
  func.func @transform_5(%arg0: i32) -> (i32, i32) {
    %c0_i32 = arith.constant 0 : i32
    %c0_i32_0 = arith.constant 0 : i32
    %c0_i32_1 = arith.constant 0 : i32
    return %c0_i32, %c0_i32_0 : i32, i32
  }
  func.func @transform_6(%arg0: i32) -> (i32, i32) {
    %c0_i32 = arith.constant 0 : i32
    %c0_i32_0 = arith.constant 0 : i32
    %c0_i32_1 = arith.constant 0 : i32
    return %c0_i32, %c0_i32_0 : i32, i32
  }
}

</mosaic_0001>

<llo_original>
// kernel: run_model.1
$region0: #{run_model.1}
  #allocation0 [shape = 'u32[]', space=smem, size = 0x4, offset = 0x4, fixed_abs, tag = 'smem constant byte address 0x4 - core index']
  #allocation1 [shape = 'u32[144,128]{1,0:T(1,128)}', space=vmem, size = 0x12000, scoped, tag = 'internal scratch']
  %s0 = inlined_call_operand.vmem [shape: f32[16,32], index: 0, kind: input, shape index: {}]
  %s1 = inlined_call_operand.vmem [shape: f32[88,152], index: 1, kind: input, shape index: {}]
  %s2 = inlined_call_operand.vmem [shape: f32[24,16], index: 2, kind: input, shape index: {}]
  %s3 = inlined_call_operand.vmem [shape: s32[2,8], index: 3, kind: output, shape index: {0}]
  %s4 = inlined_call_operand.vmem [shape: s32[2,8], index: 4, kind: output, shape index: {1}]
  %s5 = inlined_call_operand.vmem [shape: f32[16,16], index: 5, kind: output, shape index: {2}]
  %s6 = inlined_call_operand.vmem [shape: s32[16,16], index: 6, kind: output, shape index: {3}]
  %7 = xla_tuple %s3, %s4, %s5, %s6
  %s8 = sld [smem:[#allocation0]]
  $region46: #{run_model.1} parent=0
    _
  %s10 = ssub.s32 1, %s8
  %s11 = scalar_select 0, %s10, %s8
  // Predicated region
  $region2: #{run_model.1} parent=0 // pred_check
    _
  $region3: #{run_model.1} parent=0 // pred_check_branch
    %13 = sbr.rel (0) target = $region5
  $region4: #{run_model.1} parent=0 // pred_region
    _
  $region5: #{run_model.1} parent=0 // pred_fallthru
    _
  // Predicated region
  $region6: #{run_model.1} parent=0 // pred_check
    _
  $region7: #{run_model.1} parent=0 // pred_check_branch
    %15 = sbr.rel (0) target = $region9
  $region8: #{run_model.1} parent=0 // pred_region
    _
  $region9: #{run_model.1} parent=0 // pred_fallthru
    _
  // Predicated region
  $region10: #{run_model.1} parent=0 // pred_check
    _
  $region11: #{run_model.1} parent=0 // pred_check_branch
    %17 = sbr.rel (0) target = $region13
  $region12: #{run_model.1} parent=0 // pred_region
    _
  $region13: #{run_model.1} parent=0 // pred_fallthru
    _
  %v18 = vld [vmem:[%s0] sm:$0xff]
  %v19 = vld [vmem:[%s0 + $0x8] sm:$0xff]
  %v20 = vld [vmem:[%s1] sm:$0xff]
  %v21 = vld [vmem:[%s1 + $0x10] sm:$0xff]
  %v22 = vld [vmem:[%s1 + $0x20] sm:$0xff]
  %v23 = vld [vmem:[%s1 + $0x30] sm:$0xff]
  %v24 = vld [vmem:[%s1 + $0xa0] ss:$0 sm:$0xff]
  %vm25 = vcmask 261120
  %v27 = vsel %vm25, %v18, 0
  %v30 = vsel %vm25, %v19, 0
  %32 = vmatprep.subr.mxu0 0.0
  %33 = vmatpush1.msra.mxu0 %v20
  %34 = vmatprep.subr.mxu0 0.0
  %35 = vmatpush1.msra.mxu0 %v21
  %36 = vmatprep.subr.mxu0 0.0
  %37 = vmatpush1.msra.mxu0 %v22
  %38 = vmatprep.subr.mxu0 0.0
  %39 = vmatpush1.msra.mxu0 %v23
  %40 = vmatprep.subr.mxu0 0.0
  %41 = vmatpush1.msra.mxu0 0.0
  %42 = vmatprep.subr.mxu0 0.0
  %43 = vmatpush1.msra.mxu0 0.0
  %44 = vmatprep.subr.mxu0 0.0
  %45 = vmatpush1.msra.mxu0 0.0
  %46 = vmatprep.subr.mxu0 0.0
  %47 = vmatpush1.msra.mxu0 0.0
  %48 = vmatprep.subr.mxu0 0.0
  %49 = vmatpush1.msra.mxu0 0.0
  %50 = vmatprep.subr.mxu0 0.0
  %51 = vmatpush1.msra.mxu0 0.0
  %52 = vmatprep.subr.mxu0 0.0
  %53 = vmatpush1.msra.mxu0 0.0
  %54 = vmatprep.subr.mxu0 0.0
  %55 = vmatpush1.msra.mxu0 0.0
  %56 = vmatprep.subr.mxu0 0.0
  %57 = vmatpush1.msra.mxu0 0.0
  %58 = vmatprep.subr.mxu0 0.0
  %59 = vmatpush1.msra.mxu0 0.0
  %60 = vmatprep.subr.mxu0 0.0
  %61 = vmatpush1.msra.mxu0 0.0
  %62 = vmatprep.subr.mxu0 0.0
  %63 = vmatpush1.msra.mxu0 0.0
  %64 = vmatprep.subr.mxu0 0.0
  %65 = vmatpush1.msra.mxu0 0.0
  %66 = vmatprep.subr.mxu0 0.0
  %67 = vmatpush1.msra.mxu0 0.0
  %68 = vmatprep.subr.mxu0 0.0
  %69 = vmatpush1.msra.mxu0 0.0
  %70 = vmatprep.subr.mxu0 0.0
  %71 = vmatpush1.msra.mxu0 0.0
  %72 = vmatprep.subr.mxu0 0.0
  %73 = vmatpush1.msra.mxu0 0.0
  %74 = vmatprep.subr.mxu0 0.0
  %75 = vmatpush1.msra.mxu0 0.0
  %76 = vmatprep.subr.mxu0 0.0
  %77 = vmatpush1.msra.mxu0 0.0
  %78 = vmatprep.subr.mxu0 0.0
  %79 = vmatpush1.msra.mxu0 0.0
  %80 = vmatprep.subr.mxu0 0.0
  %81 = vmatpush1.msra.mxu0 0.0
  %82 = vmatprep.subr.mxu0 0.0
  %83 = vmatpush1.msra.mxu0 0.0
  %84 = vmatprep.subr.mxu0 0.0
  %85 = vmatpush1.msra.mxu0 0.0
  %86 = vmatprep.subr.mxu0 0.0
  %87 = vmatpush1.msra.mxu0 0.0
  %88 = vmatprep.subr.mxu0 0.0
  %89 = vmatpush1.msra.mxu0 0.0
  %90 = vmatprep.subr.mxu0 0.0
  %91 = vmatpush1.msra.mxu0 0.0
  %92 = vmatprep.subr.mxu0 0.0
  %93 = vmatpush1.msra.mxu0 0.0
  %94 = vmatprep.subr.mxu0 0.0
  %95 = vmatpush1.msra.mxu0 0.0
  %96 = vmatprep.mubr.f32.mxu0 0.0
  %97 = vmatmul.mubr.f32.gmra.mrb[0].mxu0 %v27
  %v98 = vpop.f32.mrb[0].mxu0
  %v99 = vadd.f32 %v24, %v98
  %v100 = vpop.f32.mrb[0].mxu0
  %101 = vmatprep.mubr.f32.mxu0 0.0
  %102 = vmatmul.mubr.f32.gmra.mrb[0].mxu0 %v30
  %v103 = vpop.f32.mrb[0].mxu0
  %v104 = vadd.f32 %v24, %v103
  %v105 = vpop.f32.mrb[0].mxu0
  %106 = vdwg.mxu0
  %vm107 = vcmask 589312
  %v108 = vsel %vm107, %v99, -inf
  %109 = vmax.xlane.f32.xlu0 %v108
  %v110 = vpop.xlane.xlu0 %109
  %v111 = vsel %vm107, %v104, -inf
  %112 = vmax.xlane.f32.xlu0 %v111
  %v113 = vpop.xlane.xlu0 %112
  %v114 = vlaneseq
  %v115 = vand.u32 %v114, 127
  %vm116 = vcmp.eq.f32.partialorder %v99, %v110
  %vm117 = vcmp.eq.f32.partialorder %v104, %v113
  %118 = vrot.lane.b32.xlu0 %v115, 64
  %v119 = vpop.permute.xlu0 %118
  %v120 = vsel %vm116, %v119, 1073741824
  %v121 = vsel %vm117, %v119, 1073741824
  %v122 = vsel %vm107, %v120, 2147483647
  %v123 = vand.u32 %v122, 65535
  %v124 = vshra.s32 %v122, 16
  %v125 = vcvt.s32.f32 %v123
  %v126 = vcvt.s32.f32 %v124
  %127 = vmin.xlane.f32.xlu0 %v126
  %v128 = vpop.xlane.xlu0 %127
  %vm129 = vcmp.eq.f32.partialorder %v126, %v128
  %v130 = vsel %vm129, %v125, inf
  %131 = vmin.xlane.f32.xlu0 %v130
  %v132 = vpop.xlane.xlu0 %131
  %v133 = vcvt.f32.s32 %v132
  %v134 = vcvt.f32.s32 %v128
  %v135 = vshll.u32 %v134, 16
  %v136 = vadd.s32 %v135, %v133
  %v137 = vsel %vm107, %v121, 2147483647
  %v138 = vand.u32 %v137, 65535
  %v139 = vshra.s32 %v137, 16
  %v140 = vcvt.s32.f32 %v138
  %v141 = vcvt.s32.f32 %v139
  %142 = vmin.xlane.f32.xlu0 %v141
  %v143 = vpop.xlane.xlu0 %142
  %vm144 = vcmp.eq.f32.partialorder %v141, %v143
  %v145 = vsel %vm144, %v140, inf
  %146 = vmin.xlane.f32.xlu0 %v145
  %v147 = vpop.xlane.xlu0 %146
  %v148 = vcvt.f32.s32 %v147
  %v149 = vcvt.f32.s32 %v143
  %v150 = vshll.u32 %v149, 16
  %v151 = vadd.s32 %v150, %v148
  %v152 = vlaneseq
  %v153 = vshrl.u32 %v152, 7
  %v154 = vsub.s32 %v115, %v153
  %v155 = vrot.slane %v136, %v154
  %v156 = vlaneseq
  %v157 = vshrl.u32 %v156, 7
  %v158 = vsub.s32 %v115, %v157
  %v159 = vrot.slane %v151, %v158
  %vm160 = vcmask 1041409
  %v161 = vsel %vm160, %v159, %v155
  %vm162 = vcmask 58368
  %163 = vst.msk [vmem:[%s3] sm:$0x3] %vm162, %v161
  %vm164 = vcmask 720448
  %v165 = vsel %vm164, %v99, -inf
  %166 = vmax.xlane.f32.xlu0 %v165
  %v167 = vpop.xlane.xlu0 %166
  %v168 = vsel %vm164, %v104, -inf
  %169 = vmax.xlane.f32.xlu0 %v168
  %v170 = vpop.xlane.xlu0 %169
  %vm171 = vcmp.eq.f32.partialorder %v99, %v167
  %vm172 = vcmp.eq.f32.partialorder %v104, %v170
  %173 = vrot.lane.b32.xlu0 %v115, 72
  %v174 = vpop.permute.xlu0 %173
  %v175 = vsel %vm171, %v174, 1073741824
  %v176 = vsel %vm172, %v174, 1073741824
  %v177 = vsel %vm164, %v175, 2147483647
  %v178 = vand.u32 %v177, 65535
  %v179 = vshra.s32 %v177, 16
  %v180 = vcvt.s32.f32 %v178
  %v181 = vcvt.s32.f32 %v179
  %182 = vmin.xlane.f32.xlu0 %v181
  %v183 = vpop.xlane.xlu0 %182
  %vm184 = vcmp.eq.f32.partialorder %v181, %v183
  %v185 = vsel %vm184, %v180, inf
  %186 = vmin.xlane.f32.xlu0 %v185
  %v187 = vpop.xlane.xlu0 %186
  %v188 = vcvt.f32.s32 %v187
  %v189 = vcvt.f32.s32 %v183
  %v190 = vshll.u32 %v189, 16
  %v191 = vadd.s32 %v190, %v188
  %v192 = vsel %vm164, %v176, 2147483647
  %v193 = vand.u32 %v192, 65535
  %v194 = vshra.s32 %v192, 16
  %v195 = vcvt.s32.f32 %v193
  %v196 = vcvt.s32.f32 %v194
  %197 = vmin.xlane.f32.xlu0 %v196
  %v198 = vpop.xlane.xlu0 %197
  %vm199 = vcmp.eq.f32.partialorder %v196, %v198
  %v200 = vsel %vm199, %v195, inf
  %201 = vmin.xlane.f32.xlu0 %v200
  %v202 = vpop.xlane.xlu0 %201
  %v203 = vcvt.f32.s32 %v202
  %v204 = vcvt.f32.s32 %v198
  %v205 = vshll.u32 %v204, 16
  %v206 = vadd.s32 %v205, %v203
  %v207 = vlaneseq
  %v208 = vshrl.u32 %v207, 7
  %v209 = vsub.s32 %v115, %v208
  %v210 = vrot.slane %v191, %v209
  %v211 = vlaneseq
  %v212 = vshrl.u32 %v211, 7
  %v213 = vsub.s32 %v115, %v212
  %v214 = vrot.slane %v206, %v213
  %v215 = vsel %vm160, %v214, %v210
  %216 = vst.msk [vmem:[%s4] sm:$0x3] %vm162, %v215
  %vm217 = vcmp.gt.f32.partialorder %v99, 0.0
  %vm218 = vcmp.gt.f32.partialorder %v104, 0.0
  %v219 = vmul.f32 %v99, 1.442695
  %v220 = vpow.pop %v219
  %v221 = vmul.f32 %v104, 1.442695
  %v222 = vpow.pop %v221
  %v223 = vsub.f32 %v220, 1.0
  %v224 = vsub.f32 %v222, 1.0
  %v225 = vsel %vm217, %v99, %v223
  %v226 = vsel %vm218, %v104, %v224
  %v227 = vld [vmem:[%s1 + $0x40] sm:$0xff]
  %v228 = vld [vmem:[%s1 + $0x48] sm:$0xff]
  %v229 = vld [vmem:[%s1 + $0x50] sm:$0xff]
  %v230 = vld [vmem:[%s1 + $0x58] sm:$0xff]
  %v231 = vld [vmem:[%s1 + $0x60] sm:$0xff]
  %v232 = vld [vmem:[%s1 + $0x68] sm:$0xff]
  %v233 = vld [vmem:[%s1 + $0x70] sm:$0xff]
  %v234 = vld [vmem:[%s1 + $0x78] sm:$0xff]
  %v235 = vld [vmem:[%s1 + $0x80] sm:$0xff]
  %v236 = vld [vmem:[%s1 + $0x88] sm:$0xff]
  %v237 = vld [vmem:[%s1 + $0x90] sm:$0xff]
  %v238 = vld [vmem:[%s1 + $0x98] sm:$0xff]
  %vm239 = vcmask 392192
  %v241 = vsel %vm239, %v225, 0
  %v244 = vsel %vm239, %v226, 0
  %246 = vmatprep.subr.mxu0 %v228
  %247 = vmatpush1.msra.mxu0 %v227
  %248 = vmatprep.subr.mxu0 %v230
  %249 = vmatpush1.msra.mxu0 %v229
  %250 = vmatprep.subr.mxu0 %v232
  %251 = vmatpush1.msra.mxu0 %v231
  %252 = vmatprep.subr.mxu0 %v234
  %253 = vmatpush1.msra.mxu0 %v233
  %254 = vmatprep.subr.mxu0 %v236
  %255 = vmatpush1.msra.mxu0 %v235
  %256 = vmatprep.subr.mxu0 %v238
  %257 = vmatpush1.msra.mxu0 %v237
  %258 = vmatprep.subr.mxu0 0.0
  %259 = vmatpush1.msra.mxu0 0.0
  %260 = vmatprep.subr.mxu0 0.0
  %261 = vmatpush1.msra.mxu0 0.0
  %262 = vmatprep.subr.mxu0 0.0
  %263 = vmatpush1.msra.mxu0 0.0
  %264 = vmatprep.subr.mxu0 0.0
  %265 = vmatpush1.msra.mxu0 0.0
  %266 = vmatprep.subr.mxu0 0.0
  %267 = vmatpush1.msra.mxu0 0.0
  %268 = vmatprep.subr.mxu0 0.0
  %269 = vmatpush1.msra.mxu0 0.0
  %270 = vmatprep.subr.mxu0 0.0
  %271 = vmatpush1.msra.mxu0 0.0
  %272 = vmatprep.subr.mxu0 0.0
  %273 = vmatpush1.msra.mxu0 0.0
  %274 = vmatprep.subr.mxu0 0.0
  %275 = vmatpush1.msra.mxu0 0.0
  %276 = vmatprep.subr.mxu0 0.0
  %277 = vmatpush1.msra.mxu0 0.0
  %278 = vmatprep.subr.mxu0 0.0
  %279 = vmatpush1.msra.mxu0 0.0
  %280 = vmatprep.subr.mxu0 0.0
  %281 = vmatpush1.msra.mxu0 0.0
  %282 = vmatprep.subr.mxu0 0.0
  %283 = vmatpush1.msra.mxu0 0.0
  %284 = vmatprep.subr.mxu0 0.0
  %285 = vmatpush1.msra.mxu0 0.0
  %286 = vmatprep.subr.mxu0 0.0
  %287 = vmatpush1.msra.mxu0 0.0
  %288 = vmatprep.subr.mxu0 0.0
  %289 = vmatpush1.msra.mxu0 0.0
  %290 = vmatprep.subr.mxu0 0.0
  %291 = vmatpush1.msra.mxu0 0.0
  %292 = vmatprep.subr.mxu0 0.0
  %293 = vmatpush1.msra.mxu0 0.0
  %294 = vmatprep.subr.mxu0 0.0
  %295 = vmatpush1.msra.mxu0 0.0
  %296 = vmatprep.subr.mxu0 0.0
  %297 = vmatpush1.msra.mxu0 0.0
  %298 = vmatprep.subr.mxu0 0.0
  %299 = vmatpush1.msra.mxu0 0.0
  %300 = vmatprep.subr.mxu0 0.0
  %301 = vmatpush1.msra.mxu0 0.0
  %302 = vmatprep.subr.mxu0 0.0
  %303 = vmatpush1.msra.mxu0 0.0
  %304 = vmatprep.subr.mxu0 0.0
  %305 = vmatpush1.msra.mxu0 0.0
  %306 = vmatprep.subr.mxu0 0.0
  %307 = vmatpush1.msra.mxu0 0.0
  %308 = vmatprep.subr.mxu0 0.0
  %309 = vmatpush1.msra.mxu0 0.0
  %310 = vmatprep.mubr.f32.mxu0 0.0
  %311 = vmatmul.mubr.f32.gmra.mrb[0].mxu0 %v241
  %v312 = vpop.f32.mrb[0].mxu0
  %v313 = vadd.f32 0.0, %v312
  %v314 = vpop.f32.mrb[0].mxu0
  %v315 = vadd.f32 0.0, %v314
  %316 = vmatprep.mubr.f32.mxu0 0.0
  %317 = vmatmul.mubr.f32.gmra.mrb[0].mxu0 %v244
  %v318 = vpop.f32.mrb[0].mxu0
  %v319 = vadd.f32 0.0, %v318
  %v320 = vpop.f32.mrb[0].mxu0
  %v321 = vadd.f32 0.0, %v320
  %322 = vdwg.mxu0
  %v323 = vld [vmem:[%s1 + $0xa0] sm:$0xff]
  %vm324 = vcmask 130048
  %v326 = vsel %vm324, %v323, 0
  %v328 = vsel %vm324, %v225, 0
  %v330 = vsel %vm324, %v226, 0
  %332 = vmatprep.subr.mxu0 0.0
  %333 = vmatpush1.xpose.msra.mxu0 %v328
  %334 = vmatprep.subr.mxu0 0.0
  %335 = vmatpush1.xpose.msra.mxu0 %v330
  %336 = vmatprep.subr.mxu0 0.0
  %337 = vmatpush1.xpose.msra.mxu0 0.0
  %338 = vmatprep.subr.mxu0 0.0
  %339 = vmatpush1.xpose.msra.mxu0 0.0
  %340 = vmatprep.subr.mxu0 0.0
  %341 = vmatpush1.xpose.msra.mxu0 0.0
  %342 = vmatprep.subr.mxu0 0.0
  %343 = vmatpush1.xpose.msra.mxu0 0.0
  %344 = vmatprep.subr.mxu0 0.0
  %345 = vmatpush1.xpose.msra.mxu0 0.0
  %346 = vmatprep.subr.mxu0 0.0
  %347 = vmatpush1.xpose.msra.mxu0 0.0
  %348 = vmatprep.subr.mxu0 0.0
  %349 = vmatpush1.xpose.msra.mxu0 0.0
  %350 = vmatprep.subr.mxu0 0.0
  %351 = vmatpush1.xpose.msra.mxu0 0.0
  %352 = vmatprep.subr.mxu0 0.0
  %353 = vmatpush1.xpose.msra.mxu0 0.0
  %354 = vmatprep.subr.mxu0 0.0
  %355 = vmatpush1.xpose.msra.mxu0 0.0
  %356 = vmatprep.subr.mxu0 0.0
  %357 = vmatpush1.xpose.msra.mxu0 0.0
  %358 = vmatprep.subr.mxu0 0.0
  %359 = vmatpush1.xpose.msra.mxu0 0.0
  %360 = vmatprep.subr.mxu0 0.0
  %361 = vmatpush1.xpose.msra.mxu0 0.0
  %362 = vmatprep.subr.mxu0 0.0
  %363 = vmatpush1.xpose.msra.mxu0 0.0
  %364 = vmatprep.subr.mxu0 0.0
  %365 = vmatpush1.xpose.msra.mxu0 0.0
  %366 = vmatprep.subr.mxu0 0.0
  %367 = vmatpush1.xpose.msra.mxu0 0.0
  %368 = vmatprep.subr.mxu0 0.0
  %369 = vmatpush1.xpose.msra.mxu0 0.0
  %370 = vmatprep.subr.mxu0 0.0
  %371 = vmatpush1.xpose.msra.mxu0 0.0
  %372 = vmatprep.subr.mxu0 0.0
  %373 = vmatpush1.xpose.msra.mxu0 0.0
  %374 = vmatprep.subr.mxu0 0.0
  %375 = vmatpush1.xpose.msra.mxu0 0.0
  %376 = vmatprep.subr.mxu0 0.0
  %377 = vmatpush1.xpose.msra.mxu0 0.0
  %378 = vmatprep.subr.mxu0 0.0
  %379 = vmatpush1.xpose.msra.mxu0 0.0
  %380 = vmatprep.subr.mxu0 0.0
  %381 = vmatpush1.xpose.msra.mxu0 0.0
  %382 = vmatprep.subr.mxu0 0.0
  %383 = vmatpush1.xpose.msra.mxu0 0.0
  %384 = vmatprep.subr.mxu0 0.0
  %385 = vmatpush1.xpose.msra.mxu0 0.0
  %386 = vmatprep.subr.mxu0 0.0
  %387 = vmatpush1.xpose.msra.mxu0 0.0
  %388 = vmatprep.subr.mxu0 0.0
  %389 = vmatpush1.xpose.msra.mxu0 0.0
  %390 = vmatprep.subr.mxu0 0.0
  %391 = vmatpush1.xpose.msra.mxu0 0.0
  %392 = vmatprep.subr.mxu0 0.0
  %393 = vmatpush1.xpose.msra.mxu0 0.0
  %394 = vmatprep.subr.mxu0 0.0
  %395 = vmatpush1.xpose.msra.mxu0 0.0
  %396 = vmatprep.mubr.f32.mxu0 0.0
  %397 = vmatmul.mubr.f32.gmra.mrb[0].mxu0 %v326
  %v398 = vpop.f32.mrb[0].mxu0
  %v399 = vadd.f32 0.0, %v398
  %v400 = vpop.f32.mrb[0].mxu0
  %401 = vdwg.mxu0
  %v402 = vld [vmem:[%s2] sm:$0xff]
  %v403 = vld [vmem:[%s2 + $0x8] sm:$0xff]
  %v404 = vlaneseq
  %v405 = vshrl.u32 %v404, 7
  %v406 = vsub.s32 1, %v405
  %v407 = vrot.slane %v399, %v406
  %408 = vrot.lane.b32.xlu0 %v225, 112
  %v409 = vpop.permute.xlu0 %408
  %410 = vrot.lane.b32.xlu0 %v226, 112
  %v411 = vpop.permute.xlu0 %410
  %v412 = vsel %vm324, %v409, 0
  %v414 = vsel %vm324, %v411, 0
  %v417 = vsel %vm324, %v315, 0
  %v420 = vsel %vm324, %v321, 0
  %422 = vmatprep.subr.mxu0 0.0
  %423 = vmatpush1.xpose.msra.mxu0 %v417
  %424 = vmatprep.subr.mxu0 0.0
  %425 = vmatpush1.xpose.msra.mxu0 %v420
  %426 = vmatprep.subr.mxu0 0.0
  %427 = vmatpush1.xpose.msra.mxu0 0.0
  %428 = vmatprep.subr.mxu0 0.0
  %429 = vmatpush1.xpose.msra.mxu0 0.0
  %430 = vmatprep.subr.mxu0 0.0
  %431 = vmatpush1.xpose.msra.mxu0 0.0
  %432 = vmatprep.subr.mxu0 0.0
  %433 = vmatpush1.xpose.msra.mxu0 0.0
  %434 = vmatprep.subr.mxu0 0.0
  %435 = vmatpush1.xpose.msra.mxu0 0.0
  %436 = vmatprep.subr.mxu0 0.0
  %437 = vmatpush1.xpose.msra.mxu0 0.0
  %438 = vmatprep.subr.mxu0 0.0
  %439 = vmatpush1.xpose.msra.mxu0 0.0
  %440 = vmatprep.subr.mxu0 0.0
  %441 = vmatpush1.xpose.msra.mxu0 0.0
  %442 = vmatprep.subr.mxu0 0.0
  %443 = vmatpush1.xpose.msra.mxu0 0.0
  %444 = vmatprep.subr.mxu0 0.0
  %445 = vmatpush1.xpose.msra.mxu0 0.0
  %446 = vmatprep.subr.mxu0 0.0
  %447 = vmatpush1.xpose.msra.mxu0 0.0
  %448 = vmatprep.subr.mxu0 0.0
  %449 = vmatpush1.xpose.msra.mxu0 0.0
  %450 = vmatprep.subr.mxu0 0.0
  %451 = vmatpush1.xpose.msra.mxu0 0.0
  %452 = vmatprep.subr.mxu0 0.0
  %453 = vmatpush1.xpose.msra.mxu0 0.0
  %454 = vmatprep.subr.mxu0 0.0
  %455 = vmatpush1.xpose.msra.mxu0 0.0
  %456 = vmatprep.subr.mxu0 0.0
  %457 = vmatpush1.xpose.msra.mxu0 0.0
  %458 = vmatprep.subr.mxu0 0.0
  %459 = vmatpush1.xpose.msra.mxu0 0.0
  %460 = vmatprep.subr.mxu0 0.0
  %461 = vmatpush1.xpose.msra.mxu0 0.0
  %462 = vmatprep.subr.mxu0 0.0
  %463 = vmatpush1.xpose.msra.mxu0 0.0
  %464 = vmatprep.subr.mxu0 0.0
  %465 = vmatpush1.xpose.msra.mxu0 0.0
  %466 = vmatprep.subr.mxu0 0.0
  %467 = vmatpush1.xpose.msra.mxu0 0.0
  %468 = vmatprep.subr.mxu0 0.0
  %469 = vmatpush1.xpose.msra.mxu0 0.0
  %470 = vmatprep.subr.mxu0 0.0
  %471 = vmatpush1.xpose.msra.mxu0 0.0
  %472 = vmatprep.subr.mxu0 0.0
  %473 = vmatpush1.xpose.msra.mxu0 0.0
  %474 = vmatprep.subr.mxu0 0.0
  %475 = vmatpush1.xpose.msra.mxu0 0.0
  %476 = vmatprep.subr.mxu0 0.0
  %477 = vmatpush1.xpose.msra.mxu0 0.0
  %478 = vmatprep.subr.mxu0 0.0
  %479 = vmatpush1.xpose.msra.mxu0 0.0
  %480 = vmatprep.subr.mxu0 0.0
  %481 = vmatpush1.xpose.msra.mxu0 0.0
  %482 = vmatprep.subr.mxu0 0.0
  %483 = vmatpush1.xpose.msra.mxu0 0.0
  %484 = vmatprep.subr.mxu0 0.0
  %485 = vmatpush1.xpose.msra.mxu0 0.0
  %486 = vmatprep.mubr.f32.mxu0 0.0
  %487 = vmatmul.mubr.f32.gmra.mrb[0].mxu0 %v412
  %v488 = vpop.f32.mrb[0].mxu0
  %v489 = vadd.f32 %v407, %v488
  %v490 = vpop.f32.mrb[0].mxu0
  %491 = vmatprep.mubr.f32.mxu0 0.0
  %492 = vmatmul.mubr.f32.gmra.mrb[0].mxu0 %v414
  %v493 = vpop.f32.mrb[0].mxu0
  %v494 = vadd.f32 %v407, %v493
  %v495 = vpop.f32.mrb[0].mxu0
  %496 = vdwg.mxu0
  %497 = vset.pattern.permute.xlu0 16
  %498 = vperm.xlu0 %497, %v315
  %v499 = vpop.permute.xlu0 %498
  %501 = vset.pattern.permute.xlu0 16
  %502 = vperm.xlu0 %501, %v321
  %v503 = vpop.permute.xlu0 %502
  %v505 = vadd.f32 %v489, %v499
  %v506 = vadd.f32 %v494, %v503
  %v507 = vadd.f32 %v505, %v402
  %v508 = vadd.f32 %v506, %v403
  %v509 = vsel %vm324, %v507, -inf
  %v510 = vsel %vm324, %v508, -inf
  %v511 = vmax.f32 %v509, %v510
  %v512 = vrot.slane %v511, 4
  %v513 = vmax.f32 %v511, %v512
  %v514 = vrot.slane %v513, 2
  %v515 = vmax.f32 %v513, %v514
  %v516 = vrot.slane %v515, 1
  %v517 = vmax.f32 %v515, %v516
  %v518 = vsub.f32 %v507, %v517
  %v519 = vsub.f32 %v508, %v517
  %v520 = vmul.f32 %v518, 1.442695
  %v521 = vpow.pop %v520
  %v522 = vmul.f32 %v519, 1.442695
  %v523 = vpow.pop %v522
  %v524 = vsel %vm324, %v521, 0.0
  %v525 = vsel %vm324, %v523, 0.0
  %v526 = vadd.f32 %v524, %v525
  %v527 = vrot.slane %v526, 4
  %v528 = vadd.f32 %v526, %v527
  %v529 = vrot.slane %v528, 2
  %v530 = vadd.f32 %v528, %v529
  %v531 = vrot.slane %v530, 1
  %v532 = vadd.f32 %v530, %v531
  %v533 = vlog2.pop %v532
  %v534 = vmul.f32 %v533, 0.6931472
  %v535 = vadd.f32 %v517, %v534
  %v536 = vsub.f32 %v507, %v535
  %v537 = vsub.f32 %v508, %v535
  %v538 = vld [vmem:[%s2 + $0x10] sm:$0x1]
  %s540 = vtos %v538
  %v541 = vstv %s540
  %543 = vrot.lane.b32.xlu0 %v225, 80
  %v544 = vpop.permute.xlu0 %543
  %545 = vrot.lane.b32.xlu0 %v226, 80
  %v546 = vpop.permute.xlu0 %545
  %v548 = vsel %vm324, %v313, 0
  %v551 = vsel %vm324, %v319, 0
  %v553 = vsel %vm324, %v544, 0
  %v555 = vsel %vm324, %v546, 0
  %557 = vmatprep.subr.mxu0 0.0
  %558 = vmatpush1.xpose.msra.mxu0 %v553
  %559 = vmatprep.subr.mxu0 0.0
  %560 = vmatpush1.xpose.msra.mxu0 %v555
  %561 = vmatprep.subr.mxu0 0.0
  %562 = vmatpush1.xpose.msra.mxu0 0.0
  %563 = vmatprep.subr.mxu0 0.0
  %564 = vmatpush1.xpose.msra.mxu0 0.0
  %565 = vmatprep.subr.mxu0 0.0
  %566 = vmatpush1.xpose.msra.mxu0 0.0
  %567 = vmatprep.subr.mxu0 0.0
  %568 = vmatpush1.xpose.msra.mxu0 0.0
  %569 = vmatprep.subr.mxu0 0.0
  %570 = vmatpush1.xpose.msra.mxu0 0.0
  %571 = vmatprep.subr.mxu0 0.0
  %572 = vmatpush1.xpose.msra.mxu0 0.0
  %573 = vmatprep.subr.mxu0 0.0
  %574 = vmatpush1.xpose.msra.mxu0 0.0
  %575 = vmatprep.subr.mxu0 0.0
  %576 = vmatpush1.xpose.msra.mxu0 0.0
  %577 = vmatprep.subr.mxu0 0.0
  %578 = vmatpush1.xpose.msra.mxu0 0.0
  %579 = vmatprep.subr.mxu0 0.0
  %580 = vmatpush1.xpose.msra.mxu0 0.0
  %581 = vmatprep.subr.mxu0 0.0
  %582 = vmatpush1.xpose.msra.mxu0 0.0
  %583 = vmatprep.subr.mxu0 0.0
  %584 = vmatpush1.xpose.msra.mxu0 0.0
  %585 = vmatprep.subr.mxu0 0.0
  %586 = vmatpush1.xpose.msra.mxu0 0.0
  %587 = vmatprep.subr.mxu0 0.0
  %588 = vmatpush1.xpose.msra.mxu0 0.0
  %589 = vmatprep.subr.mxu0 0.0
  %590 = vmatpush1.xpose.msra.mxu0 0.0
  %591 = vmatprep.subr.mxu0 0.0
  %592 = vmatpush1.xpose.msra.mxu0 0.0
  %593 = vmatprep.subr.mxu0 0.0
  %594 = vmatpush1.xpose.msra.mxu0 0.0
  %595 = vmatprep.subr.mxu0 0.0
  %596 = vmatpush1.xpose.msra.mxu0 0.0
  %597 = vmatprep.subr.mxu0 0.0
  %598 = vmatpush1.xpose.msra.mxu0 0.0
  %599 = vmatprep.subr.mxu0 0.0
  %600 = vmatpush1.xpose.msra.mxu0 0.0
  %601 = vmatprep.subr.mxu0 0.0
  %602 = vmatpush1.xpose.msra.mxu0 0.0
  %603 = vmatprep.subr.mxu0 0.0
  %604 = vmatpush1.xpose.msra.mxu0 0.0
  %605 = vmatprep.subr.mxu0 0.0
  %606 = vmatpush1.xpose.msra.mxu0 0.0
  %607 = vmatprep.subr.mxu0 0.0
  %608 = vmatpush1.xpose.msra.mxu0 0.0
  %609 = vmatprep.subr.mxu0 0.0
  %610 = vmatpush1.xpose.msra.mxu0 0.0
  %611 = vmatprep.subr.mxu0 0.0
  %612 = vmatpush1.xpose.msra.mxu0 0.0
  %613 = vmatprep.subr.mxu0 0.0
  %614 = vmatpush1.xpose.msra.mxu0 0.0
  %615 = vmatprep.subr.mxu0 0.0
  %616 = vmatpush1.xpose.msra.mxu0 0.0
  %617 = vmatprep.subr.mxu0 0.0
  %618 = vmatpush1.xpose.msra.mxu0 0.0
  %619 = vmatprep.subr.mxu0 0.0
  %620 = vmatpush1.xpose.msra.mxu0 0.0
  %621 = vmatprep.mubr.f32.mxu0 0.0
  %622 = vmatmul.mubr.f32.gmra.mrb[0].mxu0 %v548
  %v623 = vpop.f32.mrb[0].mxu0
  %v624 = vadd.f32 %v541, %v623
  %v625 = vpop.f32.mrb[0].mxu0
  %626 = vmatprep.mubr.f32.mxu0 0.0
  %627 = vmatmul.mubr.f32.gmra.mrb[0].mxu0 %v551
  %v628 = vpop.f32.mrb[0].mxu0
  %v629 = vadd.f32 %v541, %v628
  %v630 = vpop.f32.mrb[0].mxu0
  %631 = vdwg.mxu0
  %632 = vrot.lane.b32.xlu0 %v538, 127
  %v633 = vpop.permute.xlu0 %632
  %s634 = vtos %v633
  %v635 = vstv %s634
  %637 = vrot.lane.b32.xlu0 %v313, 112
  %v638 = vpop.permute.xlu0 %637
  %639 = vrot.lane.b32.xlu0 %v319, 112
  %v640 = vpop.permute.xlu0 %639
  %v641 = vsel %vm324, %v638, 0
  %v643 = vsel %vm324, %v640, 0
  %645 = vmatprep.subr.mxu0 0.0
  %646 = vmatpush1.xpose.msra.mxu0 %v553
  %647 = vmatprep.subr.mxu0 0.0
  %648 = vmatpush1.xpose.msra.mxu0 %v555
  %649 = vmatprep.subr.mxu0 0.0
  %650 = vmatpush1.xpose.msra.mxu0 0.0
  %651 = vmatprep.subr.mxu0 0.0
  %652 = vmatpush1.xpose.msra.mxu0 0.0
  %653 = vmatprep.subr.mxu0 0.0
  %654 = vmatpush1.xpose.msra.mxu0 0.0
  %655 = vmatprep.subr.mxu0 0.0
  %656 = vmatpush1.xpose.msra.mxu0 0.0
  %657 = vmatprep.subr.mxu0 0.0
  %658 = vmatpush1.xpose.msra.mxu0 0.0
  %659 = vmatprep.subr.mxu0 0.0
  %660 = vmatpush1.xpose.msra.mxu0 0.0
  %661 = vmatprep.subr.mxu0 0.0
  %662 = vmatpush1.xpose.msra.mxu0 0.0
  %663 = vmatprep.subr.mxu0 0.0
  %664 = vmatpush1.xpose.msra.mxu0 0.0
  %665 = vmatprep.subr.mxu0 0.0
  %666 = vmatpush1.xpose.msra.mxu0 0.0
  %667 = vmatprep.subr.mxu0 0.0
  %668 = vmatpush1.xpose.msra.mxu0 0.0
  %669 = vmatprep.subr.mxu0 0.0
  %670 = vmatpush1.xpose.msra.mxu0 0.0
  %671 = vmatprep.subr.mxu0 0.0
  %672 = vmatpush1.xpose.msra.mxu0 0.0
  %673 = vmatprep.subr.mxu0 0.0
  %674 = vmatpush1.xpose.msra.mxu0 0.0
  %675 = vmatprep.subr.mxu0 0.0
  %676 = vmatpush1.xpose.msra.mxu0 0.0
  %677 = vmatprep.subr.mxu0 0.0
  %678 = vmatpush1.xpose.msra.mxu0 0.0
  %679 = vmatprep.subr.mxu0 0.0
  %680 = vmatpush1.xpose.msra.mxu0 0.0
  %681 = vmatprep.subr.mxu0 0.0
  %682 = vmatpush1.xpose.msra.mxu0 0.0
  %683 = vmatprep.subr.mxu0 0.0
  %684 = vmatpush1.xpose.msra.mxu0 0.0
  %685 = vmatprep.subr.mxu0 0.0
  %686 = vmatpush1.xpose.msra.mxu0 0.0
  %687 = vmatprep.subr.mxu0 0.0
  %688 = vmatpush1.xpose.msra.mxu0 0.0
  %689 = vmatprep.subr.mxu0 0.0
  %690 = vmatpush1.xpose.msra.mxu0 0.0
  %691 = vmatprep.subr.mxu0 0.0
  %692 = vmatpush1.xpose.msra.mxu0 0.0
  %693 = vmatprep.subr.mxu0 0.0
  %694 = vmatpush1.xpose.msra.mxu0 0.0
  %695 = vmatprep.subr.mxu0 0.0
  %696 = vmatpush1.xpose.msra.mxu0 0.0
  %697 = vmatprep.subr.mxu0 0.0
  %698 = vmatpush1.xpose.msra.mxu0 0.0
  %699 = vmatprep.subr.mxu0 0.0
  %700 = vmatpush1.xpose.msra.mxu0 0.0
  %701 = vmatprep.subr.mxu0 0.0
  %702 = vmatpush1.xpose.msra.mxu0 0.0
  %703 = vmatprep.subr.mxu0 0.0
  %704 = vmatpush1.xpose.msra.mxu0 0.0
  %705 = vmatprep.subr.mxu0 0.0
  %706 = vmatpush1.xpose.msra.mxu0 0.0
  %707 = vmatprep.subr.mxu0 0.0
  %708 = vmatpush1.xpose.msra.mxu0 0.0
  %709 = vmatprep.mubr.f32.mxu0 0.0
  %710 = vmatmul.mubr.f32.gmra.mrb[0].mxu0 %v641
  %v711 = vpop.f32.mrb[0].mxu0
  %v712 = vadd.f32 %v635, %v711
  %v713 = vpop.f32.mrb[0].mxu0
  %714 = vmatprep.mubr.f32.mxu0 0.0
  %715 = vmatmul.mubr.f32.gmra.mrb[0].mxu0 %v643
  %v716 = vpop.f32.mrb[0].mxu0
  %v717 = vadd.f32 %v635, %v716
  %v718 = vpop.f32.mrb[0].mxu0
  %719 = vdwg.mxu0
  %720 = vrot.lane.b32.xlu0 %v538, 126
  %v721 = vpop.permute.xlu0 %720
  %s722 = vtos %v721
  %v723 = vstv %s722
  %725 = vrot.lane.b32.xlu0 %v313, 96
  %v726 = vpop.permute.xlu0 %725
  %727 = vrot.lane.b32.xlu0 %v319, 96
  %v728 = vpop.permute.xlu0 %727
  %v729 = vsel %vm324, %v726, 0
  %v731 = vsel %vm324, %v728, 0
  %733 = vmatprep.subr.mxu0 0.0
  %734 = vmatpush1.xpose.msra.mxu0 %v553
  %735 = vmatprep.subr.mxu0 0.0
  %736 = vmatpush1.xpose.msra.mxu0 %v555
  %737 = vmatprep.subr.mxu0 0.0
  %738 = vmatpush1.xpose.msra.mxu0 0.0
  %739 = vmatprep.subr.mxu0 0.0
  %740 = vmatpush1.xpose.msra.mxu0 0.0
  %741 = vmatprep.subr.mxu0 0.0
  %742 = vmatpush1.xpose.msra.mxu0 0.0
  %743 = vmatprep.subr.mxu0 0.0
  %744 = vmatpush1.xpose.msra.mxu0 0.0
  %745 = vmatprep.subr.mxu0 0.0
  %746 = vmatpush1.xpose.msra.mxu0 0.0
  %747 = vmatprep.subr.mxu0 0.0
  %748 = vmatpush1.xpose.msra.mxu0 0.0
  %749 = vmatprep.subr.mxu0 0.0
  %750 = vmatpush1.xpose.msra.mxu0 0.0
  %751 = vmatprep.subr.mxu0 0.0
  %752 = vmatpush1.xpose.msra.mxu0 0.0
  %753 = vmatprep.subr.mxu0 0.0
  %754 = vmatpush1.xpose.msra.mxu0 0.0
  %755 = vmatprep.subr.mxu0 0.0
  %756 = vmatpush1.xpose.msra.mxu0 0.0
  %757 = vmatprep.subr.mxu0 0.0
  %758 = vmatpush1.xpose.msra.mxu0 0.0
  %759 = vmatprep.subr.mxu0 0.0
  %760 = vmatpush1.xpose.msra.mxu0 0.0
  %761 = vmatprep.subr.mxu0 0.0
  %762 = vmatpush1.xpose.msra.mxu0 0.0
  %763 = vmatprep.subr.mxu0 0.0
  %764 = vmatpush1.xpose.msra.mxu0 0.0
  %765 = vmatprep.subr.mxu0 0.0
  %766 = vmatpush1.xpose.msra.mxu0 0.0
  %767 = vmatprep.subr.mxu0 0.0
  %768 = vmatpush1.xpose.msra.mxu0 0.0
  %769 = vmatprep.subr.mxu0 0.0
  %770 = vmatpush1.xpose.msra.mxu0 0.0
  %771 = vmatprep.subr.mxu0 0.0
  %772 = vmatpush1.xpose.msra.mxu0 0.0
  %773 = vmatprep.subr.mxu0 0.0
  %774 = vmatpush1.xpose.msra.mxu0 0.0
  %775 = vmatprep.subr.mxu0 0.0
  %776 = vmatpush1.xpose.msra.mxu0 0.0
  %777 = vmatprep.subr.mxu0 0.0
  %778 = vmatpush1.xpose.msra.mxu0 0.0
  %779 = vmatprep.subr.mxu0 0.0
  %780 = vmatpush1.xpose.msra.mxu0 0.0
  %781 = vmatprep.subr.mxu0 0.0
  %782 = vmatpush1.xpose.msra.mxu0 0.0
  %783 = vmatprep.subr.mxu0 0.0
  %784 = vmatpush1.xpose.msra.mxu0 0.0
  %785 = vmatprep.subr.mxu0 0.0
  %786 = vmatpush1.xpose.msra.mxu0 0.0
  %787 = vmatprep.subr.mxu0 0.0
  %788 = vmatpush1.xpose.msra.mxu0 0.0
  %789 = vmatprep.subr.mxu0 0.0
  %790 = vmatpush1.xpose.msra.mxu0 0.0
  %791 = vmatprep.subr.mxu0 0.0
  %792 = vmatpush1.xpose.msra.mxu0 0.0
  %793 = vmatprep.subr.mxu0 0.0
  %794 = vmatpush1.xpose.msra.mxu0 0.0
  %795 = vmatprep.subr.mxu0 0.0
  %796 = vmatpush1.xpose.msra.mxu0 0.0
  %797 = vmatprep.mubr.f32.mxu0 0.0
  %798 = vmatmul.mubr.f32.gmra.mrb[0].mxu0 %v729
  %v799 = vpop.f32.mrb[0].mxu0
  %v800 = vadd.f32 %v723, %v799
  %v801 = vpop.f32.mrb[0].mxu0
  %802 = vmatprep.mubr.f32.mxu0 0.0
  %803 = vmatmul.mubr.f32.gmra.mrb[0].mxu0 %v731
  %v804 = vpop.f32.mrb[0].mxu0
  %v805 = vadd.f32 %v723, %v804
  %v806 = vpop.f32.mrb[0].mxu0
  %807 = vdwg.mxu0
  %808 = vrot.lane.b32.xlu0 %v538, 125
  %v809 = vpop.permute.xlu0 %808
  %s810 = vtos %v809
  %v811 = vstv %s810
  %813 = vrot.lane.b32.xlu0 %v313, 80
  %v814 = vpop.permute.xlu0 %813
  %815 = vrot.lane.b32.xlu0 %v319, 80
  %v816 = vpop.permute.xlu0 %815
  %v817 = vsel %vm324, %v814, 0
  %v819 = vsel %vm324, %v816, 0
  %821 = vmatprep.subr.mxu0 0.0
  %822 = vmatpush1.xpose.msra.mxu0 %v553
  %823 = vmatprep.subr.mxu0 0.0
  %824 = vmatpush1.xpose.msra.mxu0 %v555
  %825 = vmatprep.subr.mxu0 0.0
  %826 = vmatpush1.xpose.msra.mxu0 0.0
  %827 = vmatprep.subr.mxu0 0.0
  %828 = vmatpush1.xpose.msra.mxu0 0.0
  %829 = vmatprep.subr.mxu0 0.0
  %830 = vmatpush1.xpose.msra.mxu0 0.0
  %831 = vmatprep.subr.mxu0 0.0
  %832 = vmatpush1.xpose.msra.mxu0 0.0
  %833 = vmatprep.subr.mxu0 0.0
  %834 = vmatpush1.xpose.msra.mxu0 0.0
  %835 = vmatprep.subr.mxu0 0.0
  %836 = vmatpush1.xpose.msra.mxu0 0.0
  %837 = vmatprep.subr.mxu0 0.0
  %838 = vmatpush1.xpose.msra.mxu0 0.0
  %839 = vmatprep.subr.mxu0 0.0
  %840 = vmatpush1.xpose.msra.mxu0 0.0
  %841 = vmatprep.subr.mxu0 0.0
  %842 = vmatpush1.xpose.msra.mxu0 0.0
  %843 = vmatprep.subr.mxu0 0.0
  %844 = vmatpush1.xpose.msra.mxu0 0.0
  %845 = vmatprep.subr.mxu0 0.0
  %846 = vmatpush1.xpose.msra.mxu0 0.0
  %847 = vmatprep.subr.mxu0 0.0
  %848 = vmatpush1.xpose.msra.mxu0 0.0
  %849 = vmatprep.subr.mxu0 0.0
  %850 = vmatpush1.xpose.msra.mxu0 0.0
  %851 = vmatprep.subr.mxu0 0.0
  %852 = vmatpush1.xpose.msra.mxu0 0.0
  %853 = vmatprep.subr.mxu0 0.0
  %854 = vmatpush1.xpose.msra.mxu0 0.0
  %855 = vmatprep.subr.mxu0 0.0
  %856 = vmatpush1.xpose.msra.mxu0 0.0
  %857 = vmatprep.subr.mxu0 0.0
  %858 = vmatpush1.xpose.msra.mxu0 0.0
  %859 = vmatprep.subr.mxu0 0.0
  %860 = vmatpush1.xpose.msra.mxu0 0.0
  %861 = vmatprep.subr.mxu0 0.0
  %862 = vmatpush1.xpose.msra.mxu0 0.0
  %863 = vmatprep.subr.mxu0 0.0
  %864 = vmatpush1.xpose.msra.mxu0 0.0
  %865 = vmatprep.subr.mxu0 0.0
  %866 = vmatpush1.xpose.msra.mxu0 0.0
  %867 = vmatprep.subr.mxu0 0.0
  %868 = vmatpush1.xpose.msra.mxu0 0.0
  %869 = vmatprep.subr.mxu0 0.0
  %870 = vmatpush1.xpose.msra.mxu0 0.0
  %871 = vmatprep.subr.mxu0 0.0
  %872 = vmatpush1.xpose.msra.mxu0 0.0
  %873 = vmatprep.subr.mxu0 0.0
  %874 = vmatpush1.xpose.msra.mxu0 0.0
  %875 = vmatprep.subr.mxu0 0.0
  %876 = vmatpush1.xpose.msra.mxu0 0.0
  %877 = vmatprep.subr.mxu0 0.0
  %878 = vmatpush1.xpose.msra.mxu0 0.0
  %879 = vmatprep.subr.mxu0 0.0
  %880 = vmatpush1.xpose.msra.mxu0 0.0
  %881 = vmatprep.subr.mxu0 0.0
  %882 = vmatpush1.xpose.msra.mxu0 0.0
  %883 = vmatprep.subr.mxu0 0.0
  %884 = vmatpush1.xpose.msra.mxu0 0.0
  %885 = vmatprep.mubr.f32.mxu0 0.0
  %886 = vmatmul.mubr.f32.gmra.mrb[0].mxu0 %v817
  %v887 = vpop.f32.mrb[0].mxu0
  %v888 = vadd.f32 %v811, %v887
  %v889 = vpop.f32.mrb[0].mxu0
  %890 = vmatprep.mubr.f32.mxu0 0.0
  %891 = vmatmul.mubr.f32.gmra.mrb[0].mxu0 %v819
  %v892 = vpop.f32.mrb[0].mxu0
  %v893 = vadd.f32 %v811, %v892
  %v894 = vpop.f32.mrb[0].mxu0
  %895 = vdwg.mxu0
  %896 = vrot.lane.b32.xlu0 %v538, 124
  %v897 = vpop.permute.xlu0 %896
  %s898 = vtos %v897
  %v899 = vstv %s898
  %901 = vrot.lane.b32.xlu0 %v313, 64
  %v902 = vpop.permute.xlu0 %901
  %903 = vrot.lane.b32.xlu0 %v319, 64
  %v904 = vpop.permute.xlu0 %903
  %v905 = vsel %vm324, %v902, 0
  %v907 = vsel %vm324, %v904, 0
  %909 = vmatprep.subr.mxu0 0.0
  %910 = vmatpush1.xpose.msra.mxu0 %v553
  %911 = vmatprep.subr.mxu0 0.0
  %912 = vmatpush1.xpose.msra.mxu0 %v555
  %913 = vmatprep.subr.mxu0 0.0
  %914 = vmatpush1.xpose.msra.mxu0 0.0
  %915 = vmatprep.subr.mxu0 0.0
  %916 = vmatpush1.xpose.msra.mxu0 0.0
  %917 = vmatprep.subr.mxu0 0.0
  %918 = vmatpush1.xpose.msra.mxu0 0.0
  %919 = vmatprep.subr.mxu0 0.0
  %920 = vmatpush1.xpose.msra.mxu0 0.0
  %921 = vmatprep.subr.mxu0 0.0
  %922 = vmatpush1.xpose.msra.mxu0 0.0
  %923 = vmatprep.subr.mxu0 0.0
  %924 = vmatpush1.xpose.msra.mxu0 0.0
  %925 = vmatprep.subr.mxu0 0.0
  %926 = vmatpush1.xpose.msra.mxu0 0.0
  %927 = vmatprep.subr.mxu0 0.0
  %928 = vmatpush1.xpose.msra.mxu0 0.0
  %929 = vmatprep.subr.mxu0 0.0
  %930 = vmatpush1.xpose.msra.mxu0 0.0
  %931 = vmatprep.subr.mxu0 0.0
  %932 = vmatpush1.xpose.msra.mxu0 0.0
  %933 = vmatprep.subr.mxu0 0.0
  %934 = vmatpush1.xpose.msra.mxu0 0.0
  %935 = vmatprep.subr.mxu0 0.0
  %936 = vmatpush1.xpose.msra.mxu0 0.0
  %937 = vmatprep.subr.mxu0 0.0
  %938 = vmatpush1.xpose.msra.mxu0 0.0
  %939 = vmatprep.subr.mxu0 0.0
  %940 = vmatpush1.xpose.msra.mxu0 0.0
  %941 = vmatprep.subr.mxu0 0.0
  %942 = vmatpush1.xpose.msra.mxu0 0.0
  %943 = vmatprep.subr.mxu0 0.0
  %944 = vmatpush1.xpose.msra.mxu0 0.0
  %945 = vmatprep.subr.mxu0 0.0
  %946 = vmatpush1.xpose.msra.mxu0 0.0
  %947 = vmatprep.subr.mxu0 0.0
  %948 = vmatpush1.xpose.msra.mxu0 0.0
  %949 = vmatprep.subr.mxu0 0.0
  %950 = vmatpush1.xpose.msra.mxu0 0.0
  %951 = vmatprep.subr.mxu0 0.0
  %952 = vmatpush1.xpose.msra.mxu0 0.0
  %953 = vmatprep.subr.mxu0 0.0
  %954 = vmatpush1.xpose.msra.mxu0 0.0
  %955 = vmatprep.subr.mxu0 0.0
  %956 = vmatpush1.xpose.msra.mxu0 0.0
  %957 = vmatprep.subr.mxu0 0.0
  %958 = vmatpush1.xpose.msra.mxu0 0.0
  %959 = vmatprep.subr.mxu0 0.0
  %960 = vmatpush1.xpose.msra.mxu0 0.0
  %961 = vmatprep.subr.mxu0 0.0
  %962 = vmatpush1.xpose.msra.mxu0 0.0
  %963 = vmatprep.subr.mxu0 0.0
  %964 = vmatpush1.xpose.msra.mxu0 0.0
  %965 = vmatprep.subr.mxu0 0.0
  %966 = vmatpush1.xpose.msra.mxu0 0.0
  %967 = vmatprep.subr.mxu0 0.0
  %968 = vmatpush1.xpose.msra.mxu0 0.0
  %969 = vmatprep.subr.mxu0 0.0
  %970 = vmatpush1.xpose.msra.mxu0 0.0
  %971 = vmatprep.subr.mxu0 0.0
  %972 = vmatpush1.xpose.msra.mxu0 0.0
  %973 = vmatprep.mubr.f32.mxu0 0.0
  %974 = vmatmul.mubr.f32.gmra.mrb[0].mxu0 %v905
  %v975 = vpop.f32.mrb[0].mxu0
  %v976 = vadd.f32 %v899, %v975
  %v977 = vpop.f32.mrb[0].mxu0
  %978 = vmatprep.mubr.f32.mxu0 0.0
  %979 = vmatmul.mubr.f32.gmra.mrb[0].mxu0 %v907
  %v980 = vpop.f32.mrb[0].mxu0
  %v981 = vadd.f32 %v899, %v980
  %v982 = vpop.f32.mrb[0].mxu0
  %983 = vdwg.mxu0
  %984 = vrot.lane.b32.xlu0 %v538, 123
  %v985 = vpop.permute.xlu0 %984
  %s986 = vtos %v985
  %v987 = vstv %s986
  %989 = vrot.lane.b32.xlu0 %v313, 48
  %v990 = vpop.permute.xlu0 %989
  %991 = vrot.lane.b32.xlu0 %v319, 48
  %v992 = vpop.permute.xlu0 %991
  %v993 = vsel %vm324, %v990, 0
  %v995 = vsel %vm324, %v992, 0
  %997 = vmatprep.subr.mxu0 0.0
  %998 = vmatpush1.xpose.msra.mxu0 %v553
  %999 = vmatprep.subr.mxu0 0.0
  %1000 = vmatpush1.xpose.msra.mxu0 %v555
  %1001 = vmatprep.subr.mxu0 0.0
  %1002 = vmatpush1.xpose.msra.mxu0 0.0
  %1003 = vmatprep.subr.mxu0 0.0
  %1004 = vmatpush1.xpose.msra.mxu0 0.0
  %1005 = vmatprep.subr.mxu0 0.0
  %1006 = vmatpush1.xpose.msra.mxu0 0.0
  %1007 = vmatprep.subr.mxu0 0.0
  %1008 = vmatpush1.xpose.msra.mxu0 0.0
  %1009 = vmatprep.subr.mxu0 0.0
  %1010 = vmatpush1.xpose.msra.mxu0 0.0
  %1011 = vmatprep.subr.mxu0 0.0
  %1012 = vmatpush1.xpose.msra.mxu0 0.0
  %1013 = vmatprep.subr.mxu0 0.0
  %1014 = vmatpush1.xpose.msra.mxu0 0.0
  %1015 = vmatprep.subr.mxu0 0.0
  %1016 = vmatpush1.xpose.msra.mxu0 0.0
  %1017 = vmatprep.subr.mxu0 0.0
  %1018 = vmatpush1.xpose.msra.mxu0 0.0
  %1019 = vmatprep.subr.mxu0 0.0
  %1020 = vmatpush1.xpose.msra.mxu0 0.0
  %1021 = vmatprep.subr.mxu0 0.0
  %1022 = vmatpush1.xpose.msra.mxu0 0.0
  %1023 = vmatprep.subr.mxu0 0.0
  %1024 = vmatpush1.xpose.msra.mxu0 0.0
  %1025 = vmatprep.subr.mxu0 0.0
  %1026 = vmatpush1.xpose.msra.mxu0 0.0
  %1027 = vmatprep.subr.mxu0 0.0
  %1028 = vmatpush1.xpose.msra.mxu0 0.0
  %1029 = vmatprep.subr.mxu0 0.0
  %1030 = vmatpush1.xpose.msra.mxu0 0.0
  %1031 = vmatprep.subr.mxu0 0.0
  %1032 = vmatpush1.xpose.msra.mxu0 0.0
  %1033 = vmatprep.subr.mxu0 0.0
  %1034 = vmatpush1.xpose.msra.mxu0 0.0
  %1035 = vmatprep.subr.mxu0 0.0
  %1036 = vmatpush1.xpose.msra.mxu0 0.0
  %1037 = vmatprep.subr.mxu0 0.0
  %1038 = vmatpush1.xpose.msra.mxu0 0.0
  %1039 = vmatprep.subr.mxu0 0.0
  %1040 = vmatpush1.xpose.msra.mxu0 0.0
  %1041 = vmatprep.subr.mxu0 0.0
  %1042 = vmatpush1.xpose.msra.mxu0 0.0
  %1043 = vmatprep.subr.mxu0 0.0
  %1044 = vmatpush1.xpose.msra.mxu0 0.0
  %1045 = vmatprep.subr.mxu0 0.0
  %1046 = vmatpush1.xpose.msra.mxu0 0.0
  %1047 = vmatprep.subr.mxu0 0.0
  %1048 = vmatpush1.xpose.msra.mxu0 0.0
  %1049 = vmatprep.subr.mxu0 0.0
  %1050 = vmatpush1.xpose.msra.mxu0 0.0
  %1051 = vmatprep.subr.mxu0 0.0
  %1052 = vmatpush1.xpose.msra.mxu0 0.0
  %1053 = vmatprep.subr.mxu0 0.0
  %1054 = vmatpush1.xpose.msra.mxu0 0.0
  %1055 = vmatprep.subr.mxu0 0.0
  %1056 = vmatpush1.xpose.msra.mxu0 0.0
  %1057 = vmatprep.subr.mxu0 0.0
  %1058 = vmatpush1.xpose.msra.mxu0 0.0
  %1059 = vmatprep.subr.mxu0 0.0
  %1060 = vmatpush1.xpose.msra.mxu0 0.0
  %1061 = vmatprep.mubr.f32.mxu0 0.0
  %1062 = vmatmul.mubr.f32.gmra.mrb[0].mxu0 %v993
  %v1063 = vpop.f32.mrb[0].mxu0
  %v1064 = vadd.f32 %v987, %v1063
  %v1065 = vpop.f32.mrb[0].mxu0
  %1066 = vmatprep.mubr.f32.mxu0 0.0
  %1067 = vmatmul.mubr.f32.gmra.mrb[0].mxu0 %v995
  %v1068 = vpop.f32.mrb[0].mxu0
  %v1069 = vadd.f32 %v987, %v1068
  %v1070 = vpop.f32.mrb[0].mxu0
  %1071 = vdwg.mxu0
  %1072 = vrot.lane.b32.xlu0 %v538, 122
  %v1073 = vpop.permute.xlu0 %1072
  %s1074 = vtos %v1073
  %v1075 = vstv %s1074
  %1077 = vrot.lane.b32.xlu0 %v313, 32
  %v1078 = vpop.permute.xlu0 %1077
  %1079 = vrot.lane.b32.xlu0 %v319, 32
  %v1080 = vpop.permute.xlu0 %1079
  %v1081 = vsel %vm324, %v1078, 0
  %v1083 = vsel %vm324, %v1080, 0
  %1085 = vmatprep.subr.mxu0 0.0
  %1086 = vmatpush1.xpose.msra.mxu0 %v553
  %1087 = vmatprep.subr.mxu0 0.0
  %1088 = vmatpush1.xpose.msra.mxu0 %v555
  %1089 = vmatprep.subr.mxu0 0.0
  %1090 = vmatpush1.xpose.msra.mxu0 0.0
  %1091 = vmatprep.subr.mxu0 0.0
  %1092 = vmatpush1.xpose.msra.mxu0 0.0
  %1093 = vmatprep.subr.mxu0 0.0
  %1094 = vmatpush1.xpose.msra.mxu0 0.0
  %1095 = vmatprep.subr.mxu0 0.0
  %1096 = vmatpush1.xpose.msra.mxu0 0.0
  %1097 = vmatprep.subr.mxu0 0.0
  %1098 = vmatpush1.xpose.msra.mxu0 0.0
  %1099 = vmatprep.subr.mxu0 0.0
  %1100 = vmatpush1.xpose.msra.mxu0 0.0
  %1101 = vmatprep.subr.mxu0 0.0
  %1102 = vmatpush1.xpose.msra.mxu0 0.0
  %1103 = vmatprep.subr.mxu0 0.0
  %1104 = vmatpush1.xpose.msra.mxu0 0.0
  %1105 = vmatprep.subr.mxu0 0.0
  %1106 = vmatpush1.xpose.msra.mxu0 0.0
  %1107 = vmatprep.subr.mxu0 0.0
  %1108 = vmatpush1.xpose.msra.mxu0 0.0
  %1109 = vmatprep.subr.mxu0 0.0
  %1110 = vmatpush1.xpose.msra.mxu0 0.0
  %1111 = vmatprep.subr.mxu0 0.0
  %1112 = vmatpush1.xpose.msra.mxu0 0.0
  %1113 = vmatprep.subr.mxu0 0.0
  %1114 = vmatpush1.xpose.msra.mxu0 0.0
  %1115 = vmatprep.subr.mxu0 0.0
  %1116 = vmatpush1.xpose.msra.mxu0 0.0
  %1117 = vmatprep.subr.mxu0 0.0
  %1118 = vmatpush1.xpose.msra.mxu0 0.0
  %1119 = vmatprep.subr.mxu0 0.0
  %1120 = vmatpush1.xpose.msra.mxu0 0.0
  %1121 = vmatprep.subr.mxu0 0.0
  %1122 = vmatpush1.xpose.msra.mxu0 0.0
  %1123 = vmatprep.subr.mxu0 0.0
  %1124 = vmatpush1.xpose.msra.mxu0 0.0
  %1125 = vmatprep.subr.mxu0 0.0
  %1126 = vmatpush1.xpose.msra.mxu0 0.0
  %1127 = vmatprep.subr.mxu0 0.0
  %1128 = vmatpush1.xpose.msra.mxu0 0.0
  %1129 = vmatprep.subr.mxu0 0.0
  %1130 = vmatpush1.xpose.msra.mxu0 0.0
  %1131 = vmatprep.subr.mxu0 0.0
  %1132 = vmatpush1.xpose.msra.mxu0 0.0
  %1133 = vmatprep.subr.mxu0 0.0
  %1134 = vmatpush1.xpose.msra.mxu0 0.0
  %1135 = vmatprep.subr.mxu0 0.0
  %1136 = vmatpush1.xpose.msra.mxu0 0.0
  %1137 = vmatprep.subr.mxu0 0.0
  %1138 = vmatpush1.xpose.msra.mxu0 0.0
  %1139 = vmatprep.subr.mxu0 0.0
  %1140 = vmatpush1.xpose.msra.mxu0 0.0
  %1141 = vmatprep.subr.mxu0 0.0
  %1142 = vmatpush1.xpose.msra.mxu0 0.0
  %1143 = vmatprep.subr.mxu0 0.0
  %1144 = vmatpush1.xpose.msra.mxu0 0.0
  %1145 = vmatprep.subr.mxu0 0.0
  %1146 = vmatpush1.xpose.msra.mxu0 0.0
  %1147 = vmatprep.subr.mxu0 0.0
  %1148 = vmatpush1.xpose.msra.mxu0 0.0
  %1149 = vmatprep.mubr.f32.mxu0 0.0
  %1150 = vmatmul.mubr.f32.gmra.mrb[0].mxu0 %v1081
  %v1151 = vpop.f32.mrb[0].mxu0
  %v1152 = vadd.f32 %v1075, %v1151
  %v1153 = vpop.f32.mrb[0].mxu0
  %1154 = vmatprep.mubr.f32.mxu0 0.0
  %1155 = vmatmul.mubr.f32.gmra.mrb[0].mxu0 %v1083
  %v1156 = vpop.f32.mrb[0].mxu0
  %v1157 = vadd.f32 %v1075, %v1156
  %v1158 = vpop.f32.mrb[0].mxu0
  %1159 = vdwg.mxu0
  %1160 = vrot.lane.b32.xlu0 %v538, 121
  %v1161 = vpop.permute.xlu0 %1160
  %s1162 = vtos %v1161
  %v1163 = vstv %s1162
  %1165 = vrot.lane.b32.xlu0 %v313, 16
  %v1166 = vpop.permute.xlu0 %1165
  %1167 = vrot.lane.b32.xlu0 %v319, 16
  %v1168 = vpop.permute.xlu0 %1167
  %v1169 = vsel %vm324, %v1166, 0
  %v1171 = vsel %vm324, %v1168, 0
  %1173 = vmatprep.subr.mxu0 0.0
  %1174 = vmatpush1.xpose.msra.mxu0 %v553
  %1175 = vmatprep.subr.mxu0 0.0
  %1176 = vmatpush1.xpose.msra.mxu0 %v555
  %1177 = vmatprep.subr.mxu0 0.0
  %1178 = vmatpush1.xpose.msra.mxu0 0.0
  %1179 = vmatprep.subr.mxu0 0.0
  %1180 = vmatpush1.xpose.msra.mxu0 0.0
  %1181 = vmatprep.subr.mxu0 0.0
  %1182 = vmatpush1.xpose.msra.mxu0 0.0
  %1183 = vmatprep.subr.mxu0 0.0
  %1184 = vmatpush1.xpose.msra.mxu0 0.0
  %1185 = vmatprep.subr.mxu0 0.0
  %1186 = vmatpush1.xpose.msra.mxu0 0.0
  %1187 = vmatprep.subr.mxu0 0.0
  %1188 = vmatpush1.xpose.msra.mxu0 0.0
  %1189 = vmatprep.subr.mxu0 0.0
  %1190 = vmatpush1.xpose.msra.mxu0 0.0
  %1191 = vmatprep.subr.mxu0 0.0
  %1192 = vmatpush1.xpose.msra.mxu0 0.0
  %1193 = vmatprep.subr.mxu0 0.0
  %1194 = vmatpush1.xpose.msra.mxu0 0.0
  %1195 = vmatprep.subr.mxu0 0.0
  %1196 = vmatpush1.xpose.msra.mxu0 0.0
  %1197 = vmatprep.subr.mxu0 0.0
  %1198 = vmatpush1.xpose.msra.mxu0 0.0
  %1199 = vmatprep.subr.mxu0 0.0
  %1200 = vmatpush1.xpose.msra.mxu0 0.0
  %1201 = vmatprep.subr.mxu0 0.0
  %1202 = vmatpush1.xpose.msra.mxu0 0.0
  %1203 = vmatprep.subr.mxu0 0.0
  %1204 = vmatpush1.xpose.msra.mxu0 0.0
  %1205 = vmatprep.subr.mxu0 0.0
  %1206 = vmatpush1.xpose.msra.mxu0 0.0
  %1207 = vmatprep.subr.mxu0 0.0
  %1208 = vmatpush1.xpose.msra.mxu0 0.0
  %1209 = vmatprep.subr.mxu0 0.0
  %1210 = vmatpush1.xpose.msra.mxu0 0.0
  %1211 = vmatprep.subr.mxu0 0.0
  %1212 = vmatpush1.xpose.msra.mxu0 0.0
  %1213 = vmatprep.subr.mxu0 0.0
  %1214 = vmatpush1.xpose.msra.mxu0 0.0
  %1215 = vmatprep.subr.mxu0 0.0
  %1216 = vmatpush1.xpose.msra.mxu0 0.0
  %1217 = vmatprep.subr.mxu0 0.0
  %1218 = vmatpush1.xpose.msra.mxu0 0.0
  %1219 = vmatprep.subr.mxu0 0.0
  %1220 = vmatpush1.xpose.msra.mxu0 0.0
  %1221 = vmatprep.subr.mxu0 0.0
  %1222 = vmatpush1.xpose.msra.mxu0 0.0
  %1223 = vmatprep.subr.mxu0 0.0
  %1224 = vmatpush1.xpose.msra.mxu0 0.0
  %1225 = vmatprep.subr.mxu0 0.0
  %1226 = vmatpush1.xpose.msra.mxu0 0.0
  %1227 = vmatprep.subr.mxu0 0.0
  %1228 = vmatpush1.xpose.msra.mxu0 0.0
  %1229 = vmatprep.subr.mxu0 0.0
  %1230 = vmatpush1.xpose.msra.mxu0 0.0
  %1231 = vmatprep.subr.mxu0 0.0
  %1232 = vmatpush1.xpose.msra.mxu0 0.0
  %1233 = vmatprep.subr.mxu0 0.0
  %1234 = vmatpush1.xpose.msra.mxu0 0.0
  %1235 = vmatprep.subr.mxu0 0.0
  %1236 = vmatpush1.xpose.msra.mxu0 0.0
  %1237 = vmatprep.mubr.f32.mxu0 0.0
  %1238 = vmatmul.mubr.f32.gmra.mrb[0].mxu0 %v1169
  %v1239 = vpop.f32.mrb[0].mxu0
  %v1240 = vadd.f32 %v1163, %v1239
  %v1241 = vpop.f32.mrb[0].mxu0
  %1242 = vmatprep.mubr.f32.mxu0 0.0
  %1243 = vmatmul.mubr.f32.gmra.mrb[0].mxu0 %v1171
  %v1244 = vpop.f32.mrb[0].mxu0
  %v1245 = vadd.f32 %v1163, %v1244
  %v1246 = vpop.f32.mrb[0].mxu0
  %1247 = vdwg.mxu0
  %v1248 = vsel %vm324, %v624, -inf
  %v1249 = vsel %vm324, %v712, -inf
  %v1250 = vsel %vm324, %v800, -inf
  %v1251 = vmax.f32 %v1248, %v1250
  %v1252 = vsel %vm324, %v888, -inf
  %v1253 = vmax.f32 %v1249, %v1252
  %v1254 = vsel %vm324, %v976, -inf
  %v1255 = vmax.f32 %v1251, %v1254
  %v1256 = vsel %vm324, %v1064, -inf
  %v1257 = vmax.f32 %v1253, %v1256
  %v1258 = vsel %vm324, %v1152, -inf
  %v1259 = vmax.f32 %v1255, %v1258
  %v1260 = vsel %vm324, %v1240, -inf
  %v1261 = vmax.f32 %v1257, %v1260
  %v1262 = vmax.f32 %v1259, %v1261
  %v1263 = vsel %vm324, %v629, -inf
  %v1264 = vsel %vm324, %v717, -inf
  %v1265 = vsel %vm324, %v805, -inf
  %v1266 = vmax.f32 %v1263, %v1265
  %v1267 = vsel %vm324, %v893, -inf
  %v1268 = vmax.f32 %v1264, %v1267
  %v1269 = vsel %vm324, %v981, -inf
  %v1270 = vmax.f32 %v1266, %v1269
  %v1271 = vsel %vm324, %v1069, -inf
  %v1272 = vmax.f32 %v1268, %v1271
  %v1273 = vsel %vm324, %v1157, -inf
  %v1274 = vmax.f32 %v1270, %v1273
  %v1275 = vsel %vm324, %v1245, -inf
  %v1276 = vmax.f32 %v1272, %v1275
  %v1277 = vmax.f32 %v1274, %v1276
  %vm1278 = vcmp.eq.f32.partialorder %v624, %v1262
  %vm1279 = vcmp.eq.f32.partialorder %v629, %v1277
  %vm1280 = vcmp.eq.f32.partialorder %v712, %v1262
  %vm1281 = vcmp.eq.f32.partialorder %v717, %v1277
  %vm1282 = vcmp.eq.f32.partialorder %v800, %v1262
  %vm1283 = vcmp.eq.f32.partialorder %v805, %v1277
  %vm1284 = vcmp.eq.f32.partialorder %v888, %v1262
  %vm1285 = vcmp.eq.f32.partialorder %v893, %v1277
  %vm1286 = vcmp.eq.f32.partialorder %v976, %v1262
  %vm1287 = vcmp.eq.f32.partialorder %v981, %v1277
  %vm1288 = vcmp.eq.f32.partialorder %v1064, %v1262
  %vm1289 = vcmp.eq.f32.partialorder %v1069, %v1277
  %vm1290 = vcmp.eq.f32.partialorder %v1152, %v1262
  %vm1291 = vcmp.eq.f32.partialorder %v1157, %v1277
  %vm1292 = vcmp.eq.f32.partialorder %v1240, %v1262
  %vm1293 = vcmp.eq.f32.partialorder %v1245, %v1277
  %v1294 = vsel %vm1278, 0, 8
  %v1295 = vsel %vm1279, 0, 8
  %v1296 = vsel %vm1280, 1, 8
  %v1297 = vsel %vm1281, 1, 8
  %v1298 = vsel %vm1282, 2, 8
  %v1299 = vsel %vm1283, 2, 8
  %v1300 = vsel %vm1284, 3, 8
  %v1301 = vsel %vm1285, 3, 8
  %v1302 = vsel %vm1286, 4, 8
  %v1303 = vsel %vm1287, 4, 8
  %v1304 = vsel %vm1288, 5, 8
  %v1305 = vsel %vm1289, 5, 8
  %v1306 = vsel %vm1290, 6, 8
  %v1307 = vsel %vm1291, 6, 8
  %v1308 = vsel %vm1292, 7, 8
  %v1309 = vsel %vm1293, 7, 8
  %v1310 = vsel %vm324, %v1294, 2147483647
  %v1311 = vsel %vm324, %v1296, 2147483647
  %v1312 = vsel %vm324, %v1298, 2147483647
  %vm1313 = vcmp.lt.s32.totalorder %v1310, %v1312
  %v1314 = vsel %vm1313, %v1310, %v1312
  %v1315 = vsel %vm324, %v1300, 2147483647
  %vm1316 = vcmp.lt.s32.totalorder %v1311, %v1315
  %v1317 = vsel %vm1316, %v1311, %v1315
  %v1318 = vsel %vm324, %v1302, 2147483647
  %vm1319 = vcmp.lt.s32.totalorder %v1314, %v1318
  %v1320 = vsel %vm1319, %v1314, %v1318
  %v1321 = vsel %vm324, %v1304, 2147483647
  %vm1322 = vcmp.lt.s32.totalorder %v1317, %v1321
  %v1323 = vsel %vm1322, %v1317, %v1321
  %v1324 = vsel %vm324, %v1306, 2147483647
  %vm1325 = vcmp.lt.s32.totalorder %v1320, %v1324
  %v1326 = vsel %vm1325, %v1320, %v1324
  %v1327 = vsel %vm324, %v1308, 2147483647
  %vm1328 = vcmp.lt.s32.totalorder %v1323, %v1327
  %v1329 = vsel %vm1328, %v1323, %v1327
  %vm1330 = vcmp.lt.s32.totalorder %v1326, %v1329
  %v1331 = vsel %vm1330, %v1326, %v1329
  %v1332 = vsel %vm324, %v1295, 2147483647
  %v1333 = vsel %vm324, %v1297, 2147483647
  %v1334 = vsel %vm324, %v1299, 2147483647
  %vm1335 = vcmp.lt.s32.totalorder %v1332, %v1334
  %v1336 = vsel %vm1335, %v1332, %v1334
  %v1337 = vsel %vm324, %v1301, 2147483647
  %vm1338 = vcmp.lt.s32.totalorder %v1333, %v1337
  %v1339 = vsel %vm1338, %v1333, %v1337
  %v1340 = vsel %vm324, %v1303, 2147483647
  %vm1341 = vcmp.lt.s32.totalorder %v1336, %v1340
  %v1342 = vsel %vm1341, %v1336, %v1340
  %v1343 = vsel %vm324, %v1305, 2147483647
  %vm1344 = vcmp.lt.s32.totalorder %v1339, %v1343
  %v1345 = vsel %vm1344, %v1339, %v1343
  %v1346 = vsel %vm324, %v1307, 2147483647
  %vm1347 = vcmp.lt.s32.totalorder %v1342, %v1346
  %v1348 = vsel %vm1347, %v1342, %v1346
  %v1349 = vsel %vm324, %v1309, 2147483647
  %vm1350 = vcmp.lt.s32.totalorder %v1345, %v1349
  %v1351 = vsel %vm1350, %v1345, %v1349
  %vm1352 = vcmp.lt.s32.totalorder %v1348, %v1351
  %v1353 = vsel %vm1352, %v1348, %v1351
  %v1354 = vsub.f32 %v624, %v1262
  %v1355 = vsub.f32 %v629, %v1277
  %v1356 = vsub.f32 %v712, %v1262
  %v1357 = vsub.f32 %v717, %v1277
  %v1358 = vsub.f32 %v800, %v1262
  %v1359 = vsub.f32 %v805, %v1277
  %v1360 = vsub.f32 %v888, %v1262
  %v1361 = vsub.f32 %v893, %v1277
  %v1362 = vsub.f32 %v976, %v1262
  %v1363 = vsub.f32 %v981, %v1277
  %v1364 = vsub.f32 %v1064, %v1262
  %v1365 = vsub.f32 %v1069, %v1277
  %v1366 = vsub.f32 %v1152, %v1262
  %v1367 = vsub.f32 %v1157, %v1277
  %v1368 = vsub.f32 %v1240, %v1262
  %v1369 = vsub.f32 %v1245, %v1277
  %v1370 = vmul.f32 %v1354, 1.442695
  %v1371 = vpow.pop %v1370
  %v1372 = vmul.f32 %v1355, 1.442695
  %v1373 = vpow.pop %v1372
  %v1374 = vmul.f32 %v1356, 1.442695
  %v1375 = vpow.pop %v1374
  %v1376 = vmul.f32 %v1357, 1.442695
  %v1377 = vpow.pop %v1376
  %v1378 = vmul.f32 %v1358, 1.442695
  %v1379 = vpow.pop %v1378
  %v1380 = vmul.f32 %v1359, 1.442695
  %v1381 = vpow.pop %v1380
  %v1382 = vmul.f32 %v1360, 1.442695
  %v1383 = vpow.pop %v1382
  %v1384 = vmul.f32 %v1361, 1.442695
  %v1385 = vpow.pop %v1384
  %v1386 = vmul.f32 %v1362, 1.442695
  %v1387 = vpow.pop %v1386
  %v1388 = vmul.f32 %v1363, 1.442695
  %v1389 = vpow.pop %v1388
  %v1390 = vmul.f32 %v1364, 1.442695
  %v1391 = vpow.pop %v1390
  %v1392 = vmul.f32 %v1365, 1.442695
  %v1393 = vpow.pop %v1392
  %v1394 = vmul.f32 %v1366, 1.442695
  %v1395 = vpow.pop %v1394
  %v1396 = vmul.f32 %v1367, 1.442695
  %v1397 = vpow.pop %v1396
  %v1398 = vmul.f32 %v1368, 1.442695
  %v1399 = vpow.pop %v1398
  %v1400 = vmul.f32 %v1369, 1.442695
  %v1401 = vpow.pop %v1400
  %v1402 = vsel %vm324, %v1371, 0.0
  %v1403 = vsel %vm324, %v1375, 0.0
  %v1404 = vadd.f32 %v1402, %v1403
  %v1405 = vsel %vm324, %v1379, 0.0
  %v1406 = vadd.f32 %v1404, %v1405
  %v1407 = vsel %vm324, %v1383, 0.0
  %v1408 = vadd.f32 %v1406, %v1407
  %v1409 = vsel %vm324, %v1387, 0.0
  %v1410 = vadd.f32 %v1408, %v1409
  %v1411 = vsel %vm324, %v1391, 0.0
  %v1412 = vadd.f32 %v1410, %v1411
  %v1413 = vsel %vm324, %v1395, 0.0
  %v1414 = vadd.f32 %v1412, %v1413
  %v1415 = vsel %vm324, %v1399, 0.0
  %v1416 = vadd.f32 %v1414, %v1415
  %v1417 = vsel %vm324, %v1373, 0.0
  %v1418 = vsel %vm324, %v1377, 0.0
  %v1419 = vadd.f32 %v1417, %v1418
  %v1420 = vsel %vm324, %v1381, 0.0
  %v1421 = vadd.f32 %v1419, %v1420
  %v1422 = vsel %vm324, %v1385, 0.0
  %v1423 = vadd.f32 %v1421, %v1422
  %v1424 = vsel %vm324, %v1389, 0.0
  %v1425 = vadd.f32 %v1423, %v1424
  %v1426 = vsel %vm324, %v1393, 0.0
  %v1427 = vadd.f32 %v1425, %v1426
  %v1428 = vsel %vm324, %v1397, 0.0
  %v1429 = vadd.f32 %v1427, %v1428
  %v1430 = vsel %vm324, %v1401, 0.0
  %v1431 = vadd.f32 %v1429, %v1430
  %v1432 = vlog2.pop %v1416
  %v1433 = vmul.f32 %v1432, 0.6931472
  %v1434 = vlog2.pop %v1431
  %v1435 = vmul.f32 %v1434, 0.6931472
  %v1436 = vadd.f32 %v1262, %v1433
  %v1437 = vadd.f32 %v1277, %v1435
  %v1438 = vadd.f32 %v536, %v1262
  %v1439 = vadd.f32 %v537, %v1277
  %v1440 = vsub.f32 %v1438, %v1436
  %v1441 = vsub.f32 %v1439, %v1437
  %v1442 = vmul.f32 %v1440, 1.442695
  %v1443 = vpow.pop %v1442
  %v1444 = vmul.f32 %v1441, 1.442695
  %v1445 = vpow.pop %v1444
  %1446 = vst.msk [vmem:[%s5] sm:$0xff] %vm324, %v1443
  %1447 = vst.msk [vmem:[%s5 + $0x8] sm:$0xff] %vm324, %v1445
  %1448 = vst.msk [vmem:[%s6] sm:$0xff] %vm324, %v1331
  %1449 = vst.msk [vmem:[%s6 + $0x8] sm:$0xff] %vm324, %v1353
  // Predicated region
  $region14: #{run_model.1} parent=0 // pred_check
    _
  $region15: #{run_model.1} parent=0 // pred_check_branch
    %1451 = sbr.rel (0) target = $region17
  $region16: #{run_model.1} parent=0 // pred_region
    _
  $region17: #{run_model.1} parent=0 // pred_fallthru
    _
  // Predicated region
  $region18: #{run_model.1} parent=0 // pred_check
    _
  $region19: #{run_model.1} parent=0 // pred_check_branch
    %1453 = sbr.rel (0) target = $region21
  $region20: #{run_model.1} parent=0 // pred_region
    _
  $region21: #{run_model.1} parent=0 // pred_fallthru
    _
  // Predicated region
  $region22: #{run_model.1} parent=0 // pred_check
    _
  $region23: #{run_model.1} parent=0 // pred_check_branch
    %1455 = sbr.rel (0) target = $region25
  $region24: #{run_model.1} parent=0 // pred_region
    _
  $region25: #{run_model.1} parent=0 // pred_fallthru
    _
  // Predicated region
  $region26: #{run_model.1} parent=0 // pred_check
    _
  $region27: #{run_model.1} parent=0 // pred_check_branch
    %1457 = sbr.rel (0) target = $region29
  $region28: #{run_model.1} parent=0 // pred_region
    _
  $region29: #{run_model.1} parent=0 // pred_fallthru
    _
  // Predicated region
  $region30: #{run_model.1} parent=0 // pred_check
    _
  $region31: #{run_model.1} parent=0 // pred_check_branch
    %1459 = sbr.rel (0) target = $region33
  $region32: #{run_model.1} parent=0 // pred_region
    _
  $region33: #{run_model.1} parent=0 // pred_fallthru
    _
  // Predicated region
  $region34: #{run_model.1} parent=0 // pred_check
    _
  $region35: #{run_model.1} parent=0 // pred_check_branch
    %1461 = sbr.rel (0) target = $region37
  $region36: #{run_model.1} parent=0 // pred_region
    _
  $region37: #{run_model.1} parent=0 // pred_fallthru
    _
  // Predicated region
  $region38: #{run_model.1} parent=0 // pred_check
    _
  $region39: #{run_model.1} parent=0 // pred_check_branch
    %1463 = sbr.rel (0) target = $region41
  $region40: #{run_model.1} parent=0 // pred_region
    _
  $region41: #{run_model.1} parent=0 // pred_fallthru
    _
  // Predicated region
  $region42: #{run_model.1} parent=0 // pred_check
    _
  $region43: #{run_model.1} parent=0 // pred_check_branch
    %1465 = sbr.rel (0) target = $region45
  $region44: #{run_model.1} parent=0 // pred_region
    _
  $region45: #{run_model.1} parent=0 // pred_fallthru
    _

</llo_original>
